<compile_context>
chip_gen: v7x
topology: tpu7x:2x2x1
jax: 0.10.0
libtpu: 0.0.40
codegen_flags: <defaults>
</compile_context>

<pallas_src>
import functools

import jax
import jax.numpy as jnp
from jax.experimental import pallas as pl
from jax.experimental.pallas import tpu as pltpu

EMBED_SIZE = 32          # embedding / hidden width (design choice in the module)
INPUT_SIZE = 8           # graph input capacity (>= number of graph inputs)
ONE_INPUT_OPS = ["neg", "square"]        # -> oio_linears
TWO_INPUT_OPS = ["add", "mul"]           # -> tio_linears

LANE = 128               # lane-dense feature padding (E=32 -> 128)
SUBLANE = 8              # f32 sublane count


# ----------------------------------------------------------------------------
# Fused kernel: full graph traversal (all ops) + final Linear(E, 1) epilogue
# ----------------------------------------------------------------------------
def _fused_graph_kernel(
    wid_ref, in0_ref, in1_ref,          # SMEM scalar-prefetched op schedule (int32)
    wa_ref, wb_ref, bias_ref,           # stacked op weights / biases (VMEM resident)
    wfin_ref, bfin_ref,                 # final Linear(E,1), padded lane-dense
    score_ref, last_ref,                # outputs: (8,128) dense tiles
    units_ref,                          # VMEM scratch: (max_units, 128) activations
    *, num_inputs, num_ops):
    max_units, e_pad = units_ref.shape

    # ONE_HOT graph-input embeddings: unit i = e_i for i < num_inputs, rest zero.
    row = jax.lax.broadcasted_iota(jnp.int32, (max_units, e_pad), 0)
    lane = jax.lax.broadcasted_iota(jnp.int32, (max_units, e_pad), 1)
    units_ref[...] = jnp.where((row == lane) & (row < num_inputs),
                               1.0, 0.0).astype(jnp.float32)

    # Sequential op dependency chain as an in-kernel (fully unrolled) loop.
    # Trip count is static; the op/operand indices are runtime SMEM scalars.
    for step in range(num_ops):
        wid = wid_ref[step]
        i0 = in0_ref[step]
        i1 = in1_ref[step]
        x0 = units_ref[pl.ds(i0, 1), :]                       # (1, E_PAD)
        x1 = units_ref[pl.ds(i1, 1), :]                       # (1, E_PAD)
        # two-input op: [x0|x1] @ W2^T == x0 @ W2a^T + x1 @ W2b^T  (no concat)
        # one-input op: its Wb slab is zero, so the x1 term vanishes.
        h = jnp.dot(x0, wa_ref[wid], preferred_element_type=jnp.float32)
        h = h + jnp.dot(x1, wb_ref[wid], preferred_element_type=jnp.float32)
        h = h + bias_ref[wid]                                 # (1, E_PAD)
        h = jnp.maximum(h, 0.0)                               # ReLU
        units_ref[pl.ds(num_inputs + step, 1), :] = h

    # Last unit of the traversal (== RecursiveNN.traverse return value).
    last = units_ref[pl.ds(num_inputs + num_ops - 1, 1), :]   # (1, E_PAD)
    last_ref[...] = jnp.broadcast_to(last, last_ref.shape)

    # Fused final Linear(E, 1): lane 0 of y holds the scalar score.
    y = jnp.dot(last, wfin_ref[...], preferred_element_type=jnp.float32)
    y = y + bfin_ref[...]
    score_ref[...] = jnp.broadcast_to(y, score_ref.shape)


# ----------------------------------------------------------------------------
# Deterministic parameter init (PyTorch nn.Linear-style uniform(-1/sqrt(fan_in)))
# ----------------------------------------------------------------------------
def _init_linear(key, out_features, in_features):
    kw, kb = jax.random.split(key)
    bound = 1.0 / jnp.sqrt(jnp.float32(in_features))
    w = jax.random.uniform(kw, (out_features, in_features), jnp.float32,
                           -bound, bound)
    b = jax.random.uniform(kb, (out_features,), jnp.float32, -bound, bound)
    return w, b


class RecursiveNNPallas:
    def __init__(self, input_size, embed_size, one_input_ops, two_input_ops,
                 key):
        assert embed_size <= LANE
        self.input_size = input_size
        self.embed_size = embed_size
        self.one_input_ops = list(one_input_ops)
        self.two_input_ops = list(two_input_ops)

        n_keys = 1 + len(one_input_ops) + len(two_input_ops) + 1
        keys = jax.random.split(key, n_keys)
        k = iter(keys)

        # nn.Embedding(input_size, embed_size) — unused on the ONE_HOT traversal
        # path of the original module; kept only for parameter-shape parity.
        self.embedding = jax.random.normal(next(k), (input_size, embed_size),
                                           jnp.float32)
        self.oio_linears = [_init_linear(next(k), embed_size, embed_size)
                            for _ in one_input_ops]
        self.tio_linears = [_init_linear(next(k), embed_size, 2 * embed_size)
                            for _ in two_input_ops]
        self.final_w, self.final_b = _init_linear(next(k), 1, embed_size)

        # ---- kernel-ready layout, built ONCE (hoisted out of the hot path) ----
        E = embed_size
        n_oio = len(self.one_input_ops)
        n_w = n_oio + len(self.two_input_ops)
        wa = jnp.zeros((n_w, LANE, LANE), jnp.float32)   # first-operand weights^T
        wb = jnp.zeros((n_w, LANE, LANE), jnp.float32)   # second-operand weights^T
        bs = jnp.zeros((n_w, 1, LANE), jnp.float32)
        for i, (w, b) in enumerate(self.oio_linears):            # w: (E, E)
            wa = wa.at[i, :E, :E].set(w.T)
            bs = bs.at[i, 0, :E].set(b)
        for i, (w, b) in enumerate(self.tio_linears):            # w: (E, 2E)
            j = n_oio + i
            wa = wa.at[j, :E, :E].set(w[:, :E].T)
            wb = wb.at[j, :E, :E].set(w[:, E:].T)
            bs = bs.at[j, 0, :E].set(b)
        wf = jnp.zeros((LANE, LANE), jnp.float32).at[:E, 0].set(self.final_w[0])
        bf = jnp.zeros((1, LANE), jnp.float32).at[0, 0].set(self.final_b[0])
        self.wa_stack, self.wb_stack, self.b_stack = wa, wb, bs
        self.wfin_pad, self.bfin_pad = wf, bf
        self._call_cache = {}

    # -- build / cache the fused pallas_call for a given (num_inputs, num_ops) --
    def _build_call(self, num_inputs, num_ops):
        key = (num_inputs, num_ops)
        if key in self._call_cache:
            return self._call_cache[key]
        n_w = self.wa_stack.shape[0]
        max_units = ((num_inputs + num_ops + SUBLANE - 1) // SUBLANE) * SUBLANE
        kernel = functools.partial(_fused_graph_kernel,
                                   num_inputs=num_inputs, num_ops=num_ops)
        grid_spec = pltpu.PrefetchScalarGridSpec(
            num_scalar_prefetch=3,
            grid=(1,),
            in_specs=[
                pl.BlockSpec((n_w, LANE, LANE), lambda i, *_: (0, 0, 0)),
                pl.BlockSpec((n_w, LANE, LANE), lambda i, *_: (0, 0, 0)),
                pl.BlockSpec((n_w, 1, LANE), lambda i, *_: (0, 0, 0)),
                pl.BlockSpec((LANE, LANE), lambda i, *_: (0, 0)),
                pl.BlockSpec((1, LANE), lambda i, *_: (0, 0)),
            ],
            out_specs=(
                pl.BlockSpec((SUBLANE, LANE), lambda i, *_: (0, 0)),
                pl.BlockSpec((SUBLANE, LANE), lambda i, *_: (0, 0)),
            ),
            scratch_shapes=[pltpu.VMEM((max_units, LANE), jnp.float32)],
        )
        call = pl.pallas_call(
            kernel,
            out_shape=(jax.ShapeDtypeStruct((SUBLANE, LANE), jnp.float32),
                       jax.ShapeDtypeStruct((SUBLANE, LANE), jnp.float32)),
            grid_spec=grid_spec,
            compiler_params=pltpu.CompilerParams(
                dimension_semantics=("arbitrary",)),
        )
        self._call_cache[key] = call
        return call

    # -- flatten the op list into int32 schedule tables (scalar prefetch) --
    def _op_tables(self, operations):
        n_oio = len(self.one_input_ops)
        wid, in0, in1 = [], [], []
        for op_type, idx in operations:
            if op_type in self.one_input_ops and len(idx) == 1:
                wid.append(self.one_input_ops.index(op_type))
                in0.append(idx[0])
                in1.append(idx[0])          # ignored: Wb slab is zero
            elif op_type in self.two_input_ops and len(idx) == 2:
                wid.append(n_oio + self.two_input_ops.index(op_type))
                in0.append(idx[0])
                in1.append(idx[1])
            else:
                raise ValueError(f"invalid op {op_type} with {len(idx)} inputs")
        as_i32 = lambda xs: jnp.asarray(xs, jnp.int32)
        return as_i32(wid), as_i32(in0), as_i32(in1)

    def _run(self, num_inputs, operations):
        assert 0 < num_inputs <= self.embed_size, "one-hot inputs need num_inputs <= embed_size"
        wid, in0, in1 = self._op_tables(operations)
        call = self._build_call(num_inputs, len(operations))
        score, last = call(wid, in0, in1,
                           self.wa_stack, self.wb_stack, self.b_stack,
                           self.wfin_pad, self.bfin_pad)
        return score, last

    # traverse(graph): last unit activation of the traversal
    def traverse(self, num_inputs, operations):
        _, last = self._run(num_inputs, operations)
        return last[0:1, :self.embed_size]

    # operation_counter(graph): final Linear(embed_size, 1), no activation
    def operation_counter(self, num_inputs, operations):
        score, _ = self._run(num_inputs, operations)
        return score[0:1, 0:1]


# ----------------------------------------------------------------------------
# Pure-JAX reference (same math, no Pallas) for a correctness check
# ----------------------------------------------------------------------------
def _reference(model, num_inputs, operations):
    units = []
    for i in range(num_inputs):
        oh = jnp.zeros((1, model.embed_size), jnp.float32).at[0, i].set(1.0)
        units.append(oh)
    last = units[-1]
    for op_type, in_idx in operations:
        if op_type in model.one_input_ops:
            w, b = model.oio_linears[model.one_input_ops.index(op_type)]
            x = units[in_idx[0]]
        else:
            w, b = model.tio_linears[model.two_input_ops.index(op_type)]
            x = jnp.concatenate([units[j] for j in in_idx], axis=1)
        out = jnp.maximum(x @ w.T + b[None, :], 0.0)
        units.append(out)
        last = out
    score = last @ model.final_w.T + model.final_b[None, :]
    return score, last


if __name__ == "__main__":
    key = jax.random.PRNGKey(0)
    model = RecursiveNNPallas(INPUT_SIZE, EMBED_SIZE,
                              ONE_INPUT_OPS, TWO_INPUT_OPS, key)

    # Small synthetic computation graph:
    # 4 graph inputs (one-hot), then a mix of unary / binary ops.
    num_inputs = 4
    operations = [
        ("add", [0, 1]),      # unit 4 = relu(W_add  @ [x0|x1] + b)
        ("neg", [4]),         # unit 5 = relu(W_neg  @  u4      + b)
        ("mul", [5, 2]),      # unit 6 = relu(W_mul  @ [u5|x2]  + b)
        ("square", [6]),      # unit 7 = relu(W_sq   @  u6      + b)
        ("add", [7, 3]),      # unit 8 = relu(W_add  @ [u7|x3]  + b)
    ]

    score = model.operation_counter(num_inputs, operations)
    last = model.traverse(num_inputs, operations)
    score, last = jax.block_until_ready((score, last))

    ref_score, ref_last = _reference(model, num_inputs, operations)
    assert score.shape == (1, 1), score.shape
    assert last.shape == (1, EMBED_SIZE), last.shape
    assert jnp.allclose(score, ref_score, atol=1e-5, rtol=1e-5), (score, ref_score)
    assert jnp.allclose(last, ref_last, atol=1e-5, rtol=1e-5)

    print("KERNEL_OK")
</pallas_src>

<mosaic_0001>
module attributes {stable_mosaic.version = 11 : i64} {
  func.func @_fused_graph_kernel(%arg0: i32, %arg1: memref<5xi32, #tpu.memory_space<smem>>, %arg2: memref<5xi32, #tpu.memory_space<smem>>, %arg3: memref<5xi32, #tpu.memory_space<smem>>, %arg4: memref<4x128x128xf32, #tpu.memory_space<vmem>>, %arg5: memref<4x128x128xf32, #tpu.memory_space<vmem>>, %arg6: memref<4x1x128xf32, #tpu.memory_space<vmem>>, %arg7: memref<128x128xf32, #tpu.memory_space<vmem>>, %arg8: memref<1x128xf32, #tpu.memory_space<vmem>>, %arg9: memref<8x128xf32, #tpu.memory_space<vmem>>, %arg10: memref<8x128xf32, #tpu.memory_space<vmem>>, %arg11: memref<16x128xf32, #tpu.memory_space<vmem>>) attributes {dimension_semantics = [#tpu.dimension_semantics<arbitrary>], iteration_bounds = array<i64: 1>, scalar_prefetch = 3 : i64, scratch_operands = 1 : i64, tpu.core_type = #tpu.core_type<tc>, window_params = [{pipeline_mode = #tpu.pipeline_mode<synchronous>, transform_indices = @transform_0, window_bounds = array<i64: 4, 128, 128>}, {pipeline_mode = #tpu.pipeline_mode<synchronous>, transform_indices = @transform_1, window_bounds = array<i64: 4, 128, 128>}, {pipeline_mode = #tpu.pipeline_mode<synchronous>, transform_indices = @transform_2, window_bounds = array<i64: 4, 1, 128>}, {pipeline_mode = #tpu.pipeline_mode<synchronous>, transform_indices = @transform_3, window_bounds = array<i64: 128, 128>}, {pipeline_mode = #tpu.pipeline_mode<synchronous>, transform_indices = @transform_4, window_bounds = array<i64: 1, 128>}, {pipeline_mode = #tpu.pipeline_mode<synchronous>, transform_indices = @transform_5, window_bounds = array<i64: 8, 128>}, {pipeline_mode = #tpu.pipeline_mode<synchronous>, transform_indices = @transform_6, window_bounds = array<i64: 8, 128>}]} {
    %0 = tpu.iota {dimensions = array<i32: 0>} : vector<16x128xi32>
    %1 = tpu.iota {dimensions = array<i32: 1>} : vector<16x128xi32>
    %2 = arith.cmpi eq, %0, %1 : vector<16x128xi32>
    %c4_i32 = arith.constant 4 : i32
    %3 = vector.broadcast %c4_i32 : i32 to vector<16x128xi32>
    %4 = arith.cmpi slt, %0, %3 : vector<16x128xi32>
    %5 = arith.andi %2, %4 : vector<16x128xi1>
    %cst = arith.constant 1.000000e+00 : f32
    %cst_0 = arith.constant 0.000000e+00 : f32
    %6 = vector.broadcast %cst : f32 to vector<16x128xf32>
    %7 = vector.broadcast %cst_0 : f32 to vector<16x128xf32>
    %8 = arith.select %5, %6, %7 : vector<16x128xi1>, vector<16x128xf32>
    %c0 = arith.constant 0 : index
    %c0_1 = arith.constant 0 : index
    %9 = vector.load %arg11[%c0, %c0_1] : memref<16x128xf32, #tpu.memory_space<vmem>>, vector<16x128xf32>
    tpu.vector_store %arg11[%c0, %c0_1], %8 {strides = array<i32>} : memref<16x128xf32, #tpu.memory_space<vmem>>, vector<16x128xf32>,
    %c0_2 = arith.constant 0 : index
    %10 = memref.load %arg1[%c0_2] : memref<5xi32, #tpu.memory_space<smem>>
    %c0_3 = arith.constant 0 : index
    %11 = memref.load %arg2[%c0_3] : memref<5xi32, #tpu.memory_space<smem>>
    %c0_4 = arith.constant 0 : index
    %12 = memref.load %arg3[%c0_4] : memref<5xi32, #tpu.memory_space<smem>>
    %13 = arith.index_cast %11 : i32 to index
    %c0_5 = arith.constant 0 : index
    %14 = vector.load %arg11[%13, %c0_5] : memref<16x128xf32, #tpu.memory_space<vmem>>, vector<1x128xf32>
    %15 = arith.index_cast %12 : i32 to index
    %c0_6 = arith.constant 0 : index
    %16 = vector.load %arg11[%15, %c0_6] : memref<16x128xf32, #tpu.memory_space<vmem>>, vector<1x128xf32>
    %17 = arith.index_cast %10 : i32 to index
    %c0_7 = arith.constant 0 : index
    %c0_8 = arith.constant 0 : index
    %18 = vector.load %arg4[%17, %c0_7, %c0_8] : memref<4x128x128xf32, #tpu.memory_space<vmem>>, vector<1x128x128xf32>
    %19 = vector.shape_cast %18 : vector<1x128x128xf32> to vector<128x128xf32>
    %cst_9 = arith.constant dense<0.000000e+00> : vector<1x128xf32>
    %20 = tpu.matmul %14, %19, %cst_9 {dimension_numbers = #tpu.dot_dimension_numbers<[1], [0], [0], [1], [0, 0, 1, 1], [], []>} : vector<1x128xf32>, vector<128x128xf32>, vector<1x128xf32> -> vector<1x128xf32>
    %21 = arith.index_cast %10 : i32 to index
    %c0_10 = arith.constant 0 : index
    %c0_11 = arith.constant 0 : index
    %22 = vector.load %arg5[%21, %c0_10, %c0_11] : memref<4x128x128xf32, #tpu.memory_space<vmem>>, vector<1x128x128xf32>
    %23 = vector.shape_cast %22 : vector<1x128x128xf32> to vector<128x128xf32>
    %cst_12 = arith.constant dense<0.000000e+00> : vector<1x128xf32>
    %24 = tpu.matmul %16, %23, %cst_12 {dimension_numbers = #tpu.dot_dimension_numbers<[1], [0], [0], [1], [0, 0, 1, 1], [], []>} : vector<1x128xf32>, vector<128x128xf32>, vector<1x128xf32> -> vector<1x128xf32>
    %25 = arith.addf %20, %24 : vector<1x128xf32>
    %26 = arith.index_cast %10 : i32 to index
    %c0_13 = arith.constant 0 : index
    %c0_14 = arith.constant 0 : index
    %27 = vector.load %arg6[%26, %c0_13, %c0_14] : memref<4x1x128xf32, #tpu.memory_space<vmem>>, vector<1x1x128xf32>
    %28 = vector.shape_cast %27 : vector<1x1x128xf32> to vector<1x128xf32>
    %29 = arith.addf %25, %28 : vector<1x128xf32>
    %cst_15 = arith.constant 0.000000e+00 : f32
    %30 = vector.broadcast %cst_15 : f32 to vector<1x128xf32>
    %31 = arith.maximumf %29, %30 : vector<1x128xf32>
    %c4 = arith.constant 4 : index
    %c0_16 = arith.constant 0 : index
    %32 = vector.load %arg11[%c4, %c0_16] : memref<16x128xf32, #tpu.memory_space<vmem>>, vector<1x128xf32>
    tpu.vector_store %arg11[%c4, %c0_16], %31 {strides = array<i32>} : memref<16x128xf32, #tpu.memory_space<vmem>>, vector<1x128xf32>,
    %c1 = arith.constant 1 : index
    %33 = memref.load %arg1[%c1] : memref<5xi32, #tpu.memory_space<smem>>
    %c1_17 = arith.constant 1 : index
    %34 = memref.load %arg2[%c1_17] : memref<5xi32, #tpu.memory_space<smem>>
    %c1_18 = arith.constant 1 : index
    %35 = memref.load %arg3[%c1_18] : memref<5xi32, #tpu.memory_space<smem>>
    %36 = arith.index_cast %34 : i32 to index
    %c0_19 = arith.constant 0 : index
    %37 = vector.load %arg11[%36, %c0_19] : memref<16x128xf32, #tpu.memory_space<vmem>>, vector<1x128xf32>
    %38 = arith.index_cast %35 : i32 to index
    %c0_20 = arith.constant 0 : index
    %39 = vector.load %arg11[%38, %c0_20] : memref<16x128xf32, #tpu.memory_space<vmem>>, vector<1x128xf32>
    %40 = arith.index_cast %33 : i32 to index
    %c0_21 = arith.constant 0 : index
    %c0_22 = arith.constant 0 : index
    %41 = vector.load %arg4[%40, %c0_21, %c0_22] : memref<4x128x128xf32, #tpu.memory_space<vmem>>, vector<1x128x128xf32>
    %42 = vector.shape_cast %41 : vector<1x128x128xf32> to vector<128x128xf32>
    %cst_23 = arith.constant dense<0.000000e+00> : vector<1x128xf32>
    %43 = tpu.matmul %37, %42, %cst_23 {dimension_numbers = #tpu.dot_dimension_numbers<[1], [0], [0], [1], [0, 0, 1, 1], [], []>} : vector<1x128xf32>, vector<128x128xf32>, vector<1x128xf32> -> vector<1x128xf32>
    %44 = arith.index_cast %33 : i32 to index
    %c0_24 = arith.constant 0 : index
    %c0_25 = arith.constant 0 : index
    %45 = vector.load %arg5[%44, %c0_24, %c0_25] : memref<4x128x128xf32, #tpu.memory_space<vmem>>, vector<1x128x128xf32>
    %46 = vector.shape_cast %45 : vector<1x128x128xf32> to vector<128x128xf32>
    %cst_26 = arith.constant dense<0.000000e+00> : vector<1x128xf32>
    %47 = tpu.matmul %39, %46, %cst_26 {dimension_numbers = #tpu.dot_dimension_numbers<[1], [0], [0], [1], [0, 0, 1, 1], [], []>} : vector<1x128xf32>, vector<128x128xf32>, vector<1x128xf32> -> vector<1x128xf32>
    %48 = arith.addf %43, %47 : vector<1x128xf32>
    %49 = arith.index_cast %33 : i32 to index
    %c0_27 = arith.constant 0 : index
    %c0_28 = arith.constant 0 : index
    %50 = vector.load %arg6[%49, %c0_27, %c0_28] : memref<4x1x128xf32, #tpu.memory_space<vmem>>, vector<1x1x128xf32>
    %51 = vector.shape_cast %50 : vector<1x1x128xf32> to vector<1x128xf32>
    %52 = arith.addf %48, %51 : vector<1x128xf32>
    %cst_29 = arith.constant 0.000000e+00 : f32
    %53 = vector.broadcast %cst_29 : f32 to vector<1x128xf32>
    %54 = arith.maximumf %52, %53 : vector<1x128xf32>
    %c5 = arith.constant 5 : index
    %c0_30 = arith.constant 0 : index
    %55 = vector.load %arg11[%c5, %c0_30] : memref<16x128xf32, #tpu.memory_space<vmem>>, vector<1x128xf32>
    tpu.vector_store %arg11[%c5, %c0_30], %54 {strides = array<i32>} : memref<16x128xf32, #tpu.memory_space<vmem>>, vector<1x128xf32>,
    %c2 = arith.constant 2 : index
    %56 = memref.load %arg1[%c2] : memref<5xi32, #tpu.memory_space<smem>>
    %c2_31 = arith.constant 2 : index
    %57 = memref.load %arg2[%c2_31] : memref<5xi32, #tpu.memory_space<smem>>
    %c2_32 = arith.constant 2 : index
    %58 = memref.load %arg3[%c2_32] : memref<5xi32, #tpu.memory_space<smem>>
    %59 = arith.index_cast %57 : i32 to index
    %c0_33 = arith.constant 0 : index
    %60 = vector.load %arg11[%59, %c0_33] : memref<16x128xf32, #tpu.memory_space<vmem>>, vector<1x128xf32>
    %61 = arith.index_cast %58 : i32 to index
    %c0_34 = arith.constant 0 : index
    %62 = vector.load %arg11[%61, %c0_34] : memref<16x128xf32, #tpu.memory_space<vmem>>, vector<1x128xf32>
    %63 = arith.index_cast %56 : i32 to index
    %c0_35 = arith.constant 0 : index
    %c0_36 = arith.constant 0 : index
    %64 = vector.load %arg4[%63, %c0_35, %c0_36] : memref<4x128x128xf32, #tpu.memory_space<vmem>>, vector<1x128x128xf32>
    %65 = vector.shape_cast %64 : vector<1x128x128xf32> to vector<128x128xf32>
    %cst_37 = arith.constant dense<0.000000e+00> : vector<1x128xf32>
    %66 = tpu.matmul %60, %65, %cst_37 {dimension_numbers = #tpu.dot_dimension_numbers<[1], [0], [0], [1], [0, 0, 1, 1], [], []>} : vector<1x128xf32>, vector<128x128xf32>, vector<1x128xf32> -> vector<1x128xf32>
    %67 = arith.index_cast %56 : i32 to index
    %c0_38 = arith.constant 0 : index
    %c0_39 = arith.constant 0 : index
    %68 = vector.load %arg5[%67, %c0_38, %c0_39] : memref<4x128x128xf32, #tpu.memory_space<vmem>>, vector<1x128x128xf32>
    %69 = vector.shape_cast %68 : vector<1x128x128xf32> to vector<128x128xf32>
    %cst_40 = arith.constant dense<0.000000e+00> : vector<1x128xf32>
    %70 = tpu.matmul %62, %69, %cst_40 {dimension_numbers = #tpu.dot_dimension_numbers<[1], [0], [0], [1], [0, 0, 1, 1], [], []>} : vector<1x128xf32>, vector<128x128xf32>, vector<1x128xf32> -> vector<1x128xf32>
    %71 = arith.addf %66, %70 : vector<1x128xf32>
    %72 = arith.index_cast %56 : i32 to index
    %c0_41 = arith.constant 0 : index
    %c0_42 = arith.constant 0 : index
    %73 = vector.load %arg6[%72, %c0_41, %c0_42] : memref<4x1x128xf32, #tpu.memory_space<vmem>>, vector<1x1x128xf32>
    %74 = vector.shape_cast %73 : vector<1x1x128xf32> to vector<1x128xf32>
    %75 = arith.addf %71, %74 : vector<1x128xf32>
    %cst_43 = arith.constant 0.000000e+00 : f32
    %76 = vector.broadcast %cst_43 : f32 to vector<1x128xf32>
    %77 = arith.maximumf %75, %76 : vector<1x128xf32>
    %c6 = arith.constant 6 : index
    %c0_44 = arith.constant 0 : index
    %78 = vector.load %arg11[%c6, %c0_44] : memref<16x128xf32, #tpu.memory_space<vmem>>, vector<1x128xf32>
    tpu.vector_store %arg11[%c6, %c0_44], %77 {strides = array<i32>} : memref<16x128xf32, #tpu.memory_space<vmem>>, vector<1x128xf32>,
    %c3 = arith.constant 3 : index
    %79 = memref.load %arg1[%c3] : memref<5xi32, #tpu.memory_space<smem>>
    %c3_45 = arith.constant 3 : index
    %80 = memref.load %arg2[%c3_45] : memref<5xi32, #tpu.memory_space<smem>>
    %c3_46 = arith.constant 3 : index
    %81 = memref.load %arg3[%c3_46] : memref<5xi32, #tpu.memory_space<smem>>
    %82 = arith.index_cast %80 : i32 to index
    %c0_47 = arith.constant 0 : index
    %83 = vector.load %arg11[%82, %c0_47] : memref<16x128xf32, #tpu.memory_space<vmem>>, vector<1x128xf32>
    %84 = arith.index_cast %81 : i32 to index
    %c0_48 = arith.constant 0 : index
    %85 = vector.load %arg11[%84, %c0_48] : memref<16x128xf32, #tpu.memory_space<vmem>>, vector<1x128xf32>
    %86 = arith.index_cast %79 : i32 to index
    %c0_49 = arith.constant 0 : index
    %c0_50 = arith.constant 0 : index
    %87 = vector.load %arg4[%86, %c0_49, %c0_50] : memref<4x128x128xf32, #tpu.memory_space<vmem>>, vector<1x128x128xf32>
    %88 = vector.shape_cast %87 : vector<1x128x128xf32> to vector<128x128xf32>
    %cst_51 = arith.constant dense<0.000000e+00> : vector<1x128xf32>
    %89 = tpu.matmul %83, %88, %cst_51 {dimension_numbers = #tpu.dot_dimension_numbers<[1], [0], [0], [1], [0, 0, 1, 1], [], []>} : vector<1x128xf32>, vector<128x128xf32>, vector<1x128xf32> -> vector<1x128xf32>
    %90 = arith.index_cast %79 : i32 to index
    %c0_52 = arith.constant 0 : index
    %c0_53 = arith.constant 0 : index
    %91 = vector.load %arg5[%90, %c0_52, %c0_53] : memref<4x128x128xf32, #tpu.memory_space<vmem>>, vector<1x128x128xf32>
    %92 = vector.shape_cast %91 : vector<1x128x128xf32> to vector<128x128xf32>
    %cst_54 = arith.constant dense<0.000000e+00> : vector<1x128xf32>
    %93 = tpu.matmul %85, %92, %cst_54 {dimension_numbers = #tpu.dot_dimension_numbers<[1], [0], [0], [1], [0, 0, 1, 1], [], []>} : vector<1x128xf32>, vector<128x128xf32>, vector<1x128xf32> -> vector<1x128xf32>
    %94 = arith.addf %89, %93 : vector<1x128xf32>
    %95 = arith.index_cast %79 : i32 to index
    %c0_55 = arith.constant 0 : index
    %c0_56 = arith.constant 0 : index
    %96 = vector.load %arg6[%95, %c0_55, %c0_56] : memref<4x1x128xf32, #tpu.memory_space<vmem>>, vector<1x1x128xf32>
    %97 = vector.shape_cast %96 : vector<1x1x128xf32> to vector<1x128xf32>
    %98 = arith.addf %94, %97 : vector<1x128xf32>
    %cst_57 = arith.constant 0.000000e+00 : f32
    %99 = vector.broadcast %cst_57 : f32 to vector<1x128xf32>
    %100 = arith.maximumf %98, %99 : vector<1x128xf32>
    %c7 = arith.constant 7 : index
    %c0_58 = arith.constant 0 : index
    %101 = vector.load %arg11[%c7, %c0_58] : memref<16x128xf32, #tpu.memory_space<vmem>>, vector<1x128xf32>
    tpu.vector_store %arg11[%c7, %c0_58], %100 {strides = array<i32>} : memref<16x128xf32, #tpu.memory_space<vmem>>, vector<1x128xf32>,
    %c4_59 = arith.constant 4 : index
    %102 = memref.load %arg1[%c4_59] : memref<5xi32, #tpu.memory_space<smem>>
    %c4_60 = arith.constant 4 : index
    %103 = memref.load %arg2[%c4_60] : memref<5xi32, #tpu.memory_space<smem>>
    %c4_61 = arith.constant 4 : index
    %104 = memref.load %arg3[%c4_61] : memref<5xi32, #tpu.memory_space<smem>>
    %105 = arith.index_cast %103 : i32 to index
    %c0_62 = arith.constant 0 : index
    %106 = vector.load %arg11[%105, %c0_62] : memref<16x128xf32, #tpu.memory_space<vmem>>, vector<1x128xf32>
    %107 = arith.index_cast %104 : i32 to index
    %c0_63 = arith.constant 0 : index
    %108 = vector.load %arg11[%107, %c0_63] : memref<16x128xf32, #tpu.memory_space<vmem>>, vector<1x128xf32>
    %109 = arith.index_cast %102 : i32 to index
    %c0_64 = arith.constant 0 : index
    %c0_65 = arith.constant 0 : index
    %110 = vector.load %arg4[%109, %c0_64, %c0_65] : memref<4x128x128xf32, #tpu.memory_space<vmem>>, vector<1x128x128xf32>
    %111 = vector.shape_cast %110 : vector<1x128x128xf32> to vector<128x128xf32>
    %cst_66 = arith.constant dense<0.000000e+00> : vector<1x128xf32>
    %112 = tpu.matmul %106, %111, %cst_66 {dimension_numbers = #tpu.dot_dimension_numbers<[1], [0], [0], [1], [0, 0, 1, 1], [], []>} : vector<1x128xf32>, vector<128x128xf32>, vector<1x128xf32> -> vector<1x128xf32>
    %113 = arith.index_cast %102 : i32 to index
    %c0_67 = arith.constant 0 : index
    %c0_68 = arith.constant 0 : index
    %114 = vector.load %arg5[%113, %c0_67, %c0_68] : memref<4x128x128xf32, #tpu.memory_space<vmem>>, vector<1x128x128xf32>
    %115 = vector.shape_cast %114 : vector<1x128x128xf32> to vector<128x128xf32>
    %cst_69 = arith.constant dense<0.000000e+00> : vector<1x128xf32>
    %116 = tpu.matmul %108, %115, %cst_69 {dimension_numbers = #tpu.dot_dimension_numbers<[1], [0], [0], [1], [0, 0, 1, 1], [], []>} : vector<1x128xf32>, vector<128x128xf32>, vector<1x128xf32> -> vector<1x128xf32>
    %117 = arith.addf %112, %116 : vector<1x128xf32>
    %118 = arith.index_cast %102 : i32 to index
    %c0_70 = arith.constant 0 : index
    %c0_71 = arith.constant 0 : index
    %119 = vector.load %arg6[%118, %c0_70, %c0_71] : memref<4x1x128xf32, #tpu.memory_space<vmem>>, vector<1x1x128xf32>
    %120 = vector.shape_cast %119 : vector<1x1x128xf32> to vector<1x128xf32>
    %121 = arith.addf %117, %120 : vector<1x128xf32>
    %cst_72 = arith.constant 0.000000e+00 : f32
    %122 = vector.broadcast %cst_72 : f32 to vector<1x128xf32>
    %123 = arith.maximumf %121, %122 : vector<1x128xf32>
    %c8 = arith.constant 8 : index
    %c0_73 = arith.constant 0 : index
    %124 = vector.load %arg11[%c8, %c0_73] : memref<16x128xf32, #tpu.memory_space<vmem>>, vector<1x128xf32>
    tpu.vector_store %arg11[%c8, %c0_73], %123 {strides = array<i32>} : memref<16x128xf32, #tpu.memory_space<vmem>>, vector<1x128xf32>,
    %c8_74 = arith.constant 8 : index
    %c0_75 = arith.constant 0 : index
    %125 = vector.load %arg11[%c8_74, %c0_75] : memref<16x128xf32, #tpu.memory_space<vmem>>, vector<1x128xf32>
    %126 = vector.shape_cast %125 : vector<1x128xf32> to vector<1x128xf32>
    %127 = vector.broadcast %126 : vector<1x128xf32> to vector<8x128xf32>
    %c0_76 = arith.constant 0 : index
    %c0_77 = arith.constant 0 : index
    %128 = vector.load %arg10[%c0_76, %c0_77] : memref<8x128xf32, #tpu.memory_space<vmem>>, vector<8x128xf32>
    tpu.vector_store %arg10[%c0_76, %c0_77], %127 {strides = array<i32>} : memref<8x128xf32, #tpu.memory_space<vmem>>, vector<8x128xf32>,
    %c0_78 = arith.constant 0 : index
    %c0_79 = arith.constant 0 : index
    %129 = vector.load %arg7[%c0_78, %c0_79] : memref<128x128xf32, #tpu.memory_space<vmem>>, vector<128x128xf32>
    %cst_80 = arith.constant dense<0.000000e+00> : vector<1x128xf32>
    %130 = tpu.matmul %125, %129, %cst_80 {dimension_numbers = #tpu.dot_dimension_numbers<[1], [0], [0], [1], [0, 0, 1, 1], [], []>} : vector<1x128xf32>, vector<128x128xf32>, vector<1x128xf32> -> vector<1x128xf32>
    %c0_81 = arith.constant 0 : index
    %c0_82 = arith.constant 0 : index
    %131 = vector.load %arg8[%c0_81, %c0_82] : memref<1x128xf32, #tpu.memory_space<vmem>>, vector<1x128xf32>
    %132 = arith.addf %130, %131 : vector<1x128xf32>
    %133 = vector.shape_cast %132 : vector<1x128xf32> to vector<1x128xf32>
    %134 = vector.broadcast %133 : vector<1x128xf32> to vector<8x128xf32>
    %c0_83 = arith.constant 0 : index
    %c0_84 = arith.constant 0 : index
    %135 = vector.load %arg9[%c0_83, %c0_84] : memref<8x128xf32, #tpu.memory_space<vmem>>, vector<8x128xf32>
    tpu.vector_store %arg9[%c0_83, %c0_84], %134 {strides = array<i32>} : memref<8x128xf32, #tpu.memory_space<vmem>>, vector<8x128xf32>,
    return
  }
  func.func @transform_0(%arg0: i32, %arg1: memref<5xi32, #tpu.memory_space<smem>>, %arg2: memref<5xi32, #tpu.memory_space<smem>>, %arg3: memref<5xi32, #tpu.memory_space<smem>>) -> (i32, i32, i32) {
    %c0_i32 = arith.constant 0 : i32
    %c0_i32_0 = arith.constant 0 : i32
    %c0_i32_1 = arith.constant 0 : i32
    %c0_i32_2 = arith.constant 0 : i32
    return %c0_i32, %c0_i32_0, %c0_i32_1 : i32, i32, i32
  }
  func.func @transform_1(%arg0: i32, %arg1: memref<5xi32, #tpu.memory_space<smem>>, %arg2: memref<5xi32, #tpu.memory_space<smem>>, %arg3: memref<5xi32, #tpu.memory_space<smem>>) -> (i32, i32, i32) {
    %c0_i32 = arith.constant 0 : i32
    %c0_i32_0 = arith.constant 0 : i32
    %c0_i32_1 = arith.constant 0 : i32
    %c0_i32_2 = arith.constant 0 : i32
    return %c0_i32, %c0_i32_0, %c0_i32_1 : i32, i32, i32
  }
  func.func @transform_2(%arg0: i32, %arg1: memref<5xi32, #tpu.memory_space<smem>>, %arg2: memref<5xi32, #tpu.memory_space<smem>>, %arg3: memref<5xi32, #tpu.memory_space<smem>>) -> (i32, i32, i32) {
    %c0_i32 = arith.constant 0 : i32
    %c0_i32_0 = arith.constant 0 : i32
    %c0_i32_1 = arith.constant 0 : i32
    %c0_i32_2 = arith.constant 0 : i32
    return %c0_i32, %c0_i32_0, %c0_i32_1 : i32, i32, i32
  }
  func.func @transform_3(%arg0: i32, %arg1: memref<5xi32, #tpu.memory_space<smem>>, %arg2: memref<5xi32, #tpu.memory_space<smem>>, %arg3: memref<5xi32, #tpu.memory_space<smem>>) -> (i32, i32) {
    %c0_i32 = arith.constant 0 : i32
    %c0_i32_0 = arith.constant 0 : i32
    %c0_i32_1 = arith.constant 0 : i32
    return %c0_i32, %c0_i32_0 : i32, i32
  }
  func.func @transform_4(%arg0: i32, %arg1: memref<5xi32, #tpu.memory_space<smem>>, %arg2: memref<5xi32, #tpu.memory_space<smem>>, %arg3: memref<5xi32, #tpu.memory_space<smem>>) -> (i32, i32) {
    %c0_i32 = arith.constant 0 : i32
    %c0_i32_0 = arith.constant 0 : i32
    %c0_i32_1 = arith.constant 0 : i32
    return %c0_i32, %c0_i32_0 : i32, i32
  }
  func.func @transform_5(%arg0: i32, %arg1: memref<5xi32, #tpu.memory_space<smem>>, %arg2: memref<5xi32, #tpu.memory_space<smem>>, %arg3: memref<5xi32, #tpu.memory_space<smem>>) -> (i32, i32) {
    %c0_i32 = arith.constant 0 : i32
    %c0_i32_0 = arith.constant 0 : i32
    %c0_i32_1 = arith.constant 0 : i32
    return %c0_i32, %c0_i32_0 : i32, i32
  }
  func.func @transform_6(%arg0: i32, %arg1: memref<5xi32, #tpu.memory_space<smem>>, %arg2: memref<5xi32, #tpu.memory_space<smem>>, %arg3: memref<5xi32, #tpu.memory_space<smem>>) -> (i32, i32) {
    %c0_i32 = arith.constant 0 : i32
    %c0_i32_0 = arith.constant 0 : i32
    %c0_i32_1 = arith.constant 0 : i32
    return %c0_i32, %c0_i32_0 : i32, i32
  }
}

</mosaic_0001>

<llo_original>
// kernel: tpu_custom_call.1
$region0: #{tpu_custom_call.1}
  #allocation0 [shape = 'u32[]', space=smem, size = 0x4, offset = 0x4, fixed_abs, tag = 'smem constant byte address 0x4 - core index']
  #allocation1 [shape = 'u32[144,128]{1,0:T(1,128)}', space=vmem, size = 0x12000, scoped, tag = 'internal scratch']
  #allocation2 [shape = 'f32[16,128]{1,0:T(8,128)}', space=vmem, size = 0x2000, scoped, tag = 'scratch operand']
  #allocation3 [shape = 's32[1]{0}', space=sflag, size = 0x4, scoped, tag = 'scoped memory for tpu_custom_call.1']
  #allocation4 [shape = 'u8[512]{0}', space=smem, size = 0x200, scoped, tag = 'prefetched SMEM operand 0']
  #allocation5 [shape = 'u8[512]{0}', space=smem, size = 0x200, scoped, tag = 'prefetched SMEM operand 1']
  #allocation6 [shape = 'u8[512]{0}', space=smem, size = 0x200, scoped, tag = 'prefetched SMEM operand 2']
  %s0 = inlined_call_operand.hbm [shape: s32[5], index: 0, kind: input, shape index: {}]
  %s1 = inlined_call_operand.vmem [shape: s32[5], index: 1, kind: input, shape index: {}]
  %s2 = inlined_call_operand.vmem [shape: s32[5], index: 2, kind: input, shape index: {}]
  %s3 = inlined_call_operand.hbm [shape: f32[4,128,128], index: 3, kind: input, shape index: {}]
  %s4 = inlined_call_operand.hbm [shape: f32[4,128,128], index: 4, kind: input, shape index: {}]
  %s5 = inlined_call_operand.vmem [shape: f32[4,1,128], index: 5, kind: input, shape index: {}]
  %s6 = inlined_call_operand.hbm [shape: f32[128,128], index: 6, kind: input, shape index: {}]
  %s7 = inlined_call_operand.vmem [shape: f32[1,128], index: 7, kind: input, shape index: {}]
  %s8 = inlined_call_operand.hbm [shape: f32[8,128], index: 8, kind: output, shape index: {0}]
  %s9 = inlined_call_operand.hbm [shape: f32[8,128], index: 9, kind: output, shape index: {1}]
  %10 = xla_tuple %s8, %s9
  %s11 = sld [smem:[#allocation0]]
  $region50: #{tpu_custom_call.1} parent=0
    _
  %s13 = ssub.s32 1, %s11
  %s14 = scalar_select 0, %s13, %s11
  %16 = dma.hbm_to_smem %s0, 16, [#allocation4], [#allocation3]
  %s17 = sshll.u32 %s1, 4
  %s18 = int_to_ptr.vmem [resolvable:$true] %s17
  %20 = dma.vmem_to_smem %s18, 16, [#allocation5], [#allocation3]
  %s21 = sshll.u32 %s2, 4
  %s22 = int_to_ptr.vmem [resolvable:$true] %s21
  %24 = dma.vmem_to_smem %s22, 16, [#allocation6], [#allocation3]
  %25 = dma.done [#allocation3], 48
  %26 = sfence
  $region1: #{tpu_custom_call.1} parent=0
    #allocation7 [shape = 'u8[262144]{0}', space=vmem, size = 0x40000, scoped, tag = 'input window, operand 3, single buffered']
    #allocation8 [shape = 's32[1]{0}', space=sflag, size = 0x4, scoped, tag = 'scoped memory for tpu_custom_call.1']
    #allocation9 [shape = 's32[1]{0}', space=sflag, size = 0x4, scoped, tag = 'scoped memory for tpu_custom_call.1']
    #allocation10 [shape = 'u8[262144]{0}', space=vmem, size = 0x40000, scoped, tag = 'input window, operand 4, single buffered']
    #allocation11 [shape = 's32[1]{0}', space=sflag, size = 0x4, scoped, tag = 'scoped memory for tpu_custom_call.1']
    #allocation12 [shape = 'u8[65536]{0}', space=vmem, size = 0x10000, scoped, tag = 'input window, operand 6, single buffered']
    #allocation13 [shape = 'u8[4096]{0}', space=vmem, size = 0x1000, scoped, tag = 'output window, operand 0, single buffered']
    #allocation14 [shape = 'u8[4096]{0}', space=vmem, size = 0x1000, scoped, tag = 'output window, operand 1, single buffered']
    #allocation15 [shape = 's32[1]{0}', space=sflag, size = 0x4, scoped, tag = 'scoped memory for tpu_custom_call.1']
    %27 = vsyncpa [#allocation8], 0
    %28 = vsyncpa [#allocation11], 0
    %29 = vsyncpa [#allocation9], 0
    %30 = vsyncpa [#allocation15], 0
    // Predicated region
    $region2: #{tpu_custom_call.1} parent=1 // pred_check
      _
    $region3: #{tpu_custom_call.1} parent=1 // pred_check_branch
      %32 = sbr.rel (0) target = $region5
    $region4: #{tpu_custom_call.1} parent=1 // pred_region
      %s34 = ssub.s32 8192, 8192
      %35 = vsyncadd [#allocation8], %s34
      %s36 = sshll.u32 [#allocation7], 4
      %s37 = int_to_ptr.vmem [resolvable:$true] %s36
      %42 = dma.hbm_to_vmem [thread:$0]  %s3, 8192, %s37, [#allocation8], 128, 128, 8
    $region5: #{tpu_custom_call.1} parent=1 // pred_fallthru
      _
    // Predicated region
    $region6: #{tpu_custom_call.1} parent=1 // pred_check
      _
    $region7: #{tpu_custom_call.1} parent=1 // pred_check_branch
      %44 = sbr.rel (0) target = $region9
    $region8: #{tpu_custom_call.1} parent=1 // pred_region
      %s46 = ssub.s32 8192, 8192
      %47 = vsyncadd [#allocation11], %s46
      %s48 = sshll.u32 [#allocation10], 4
      %s49 = int_to_ptr.vmem [resolvable:$true] %s48
      %54 = dma.hbm_to_vmem [thread:$0]  %s4, 8192, %s49, [#allocation11], 128, 128, 8
    $region9: #{tpu_custom_call.1} parent=1 // pred_fallthru
      _
    // Predicated region
    $region10: #{tpu_custom_call.1} parent=1 // pred_check
      _
    $region11: #{tpu_custom_call.1} parent=1 // pred_check_branch
      %56 = sbr.rel (0) target = $region13
    $region12: #{tpu_custom_call.1} parent=1 // pred_region
      _
    $region13: #{tpu_custom_call.1} parent=1 // pred_fallthru
      _
    // Predicated region
    $region14: #{tpu_custom_call.1} parent=1 // pred_check
      _
    $region15: #{tpu_custom_call.1} parent=1 // pred_check_branch
      %58 = sbr.rel (0) target = $region17
    $region16: #{tpu_custom_call.1} parent=1 // pred_region
      %s60 = ssub.s32 2048, 2048
      %61 = vsyncadd [#allocation11], %s60
      %s62 = sshll.u32 [#allocation12], 4
      %s63 = int_to_ptr.vmem [resolvable:$true] %s62
      %68 = dma.hbm_to_vmem [thread:$0]  %s6, 2048, %s63, [#allocation11], 128, 128, 8
    $region17: #{tpu_custom_call.1} parent=1 // pred_fallthru
      _
    // Predicated region
    $region18: #{tpu_custom_call.1} parent=1 // pred_check
      _
    $region19: #{tpu_custom_call.1} parent=1 // pred_check_branch
      %70 = sbr.rel (0) target = $region21
    $region20: #{tpu_custom_call.1} parent=1 // pred_region
      _
    $region21: #{tpu_custom_call.1} parent=1 // pred_fallthru
      _
    // Predicated region
    $region22: #{tpu_custom_call.1} parent=1 // pred_check
      _
    $region23: #{tpu_custom_call.1} parent=1 // pred_check_branch
      %72 = sbr.rel (0) target = $region25
    $region24: #{tpu_custom_call.1} parent=1 // pred_region
      %73 = dma.done [#allocation8], 8192
    $region25: #{tpu_custom_call.1} parent=1 // pred_fallthru
      _
    // Predicated region
    $region26: #{tpu_custom_call.1} parent=1 // pred_check
      _
    $region27: #{tpu_custom_call.1} parent=1 // pred_check_branch
      %75 = sbr.rel (0) target = $region29
    $region28: #{tpu_custom_call.1} parent=1 // pred_region
      %76 = dma.done [#allocation11], 8192
    $region29: #{tpu_custom_call.1} parent=1 // pred_fallthru
      _
    // Predicated region
    $region30: #{tpu_custom_call.1} parent=1 // pred_check
      _
    $region31: #{tpu_custom_call.1} parent=1 // pred_check_branch
      %78 = sbr.rel (0) target = $region33
    $region32: #{tpu_custom_call.1} parent=1 // pred_region
      %79 = dma.done [#allocation11], 2048
    $region33: #{tpu_custom_call.1} parent=1 // pred_fallthru
      _
    %v80 = vlaneseq
    %v81 = vshrl.u32 %v80, 7
    %v82 = vadd.s32 %v81, 8
    %v83 = vlaneseq
    %v84 = vand.u32 %v83, 127
    %vm85 = vcmp.eq.s32.totalorder %v81, %v84
    %vm86 = vcmp.eq.s32.totalorder %v82, %v84
    %vm87 = vcmp.lt.s32.totalorder %v81, 4
    %vm88 = vcmp.lt.s32.totalorder %v82, 4
    %vm89 = vmand %vm85, %vm87
    %vm90 = vmand %vm86, %vm88
    %v91 = vsel %vm89, 1.0, 0.0
    %v92 = vsel %vm90, 1.0, 0.0
    %93 = vst [vmem:[#allocation2] sm:$0xff] %v91
    %94 = vst [vmem:[#allocation2 + $0x8] sm:$0xff] %v92
    %s95 = sld [smem:[#allocation4]]
    %s96 = sld [smem:[#allocation5]]
    %s97 = sld [smem:[#allocation6]]
    %s98 = scalar_lea.vmem [#allocation2], %s96
    %v99 = vld [vmem:[%s98] sm:$0x1]
    %s100 = scalar_lea.vmem [#allocation2], %s97
    %v101 = vld [vmem:[%s100] sm:$0x1]
    %s102 = smul.u32 %s95, 128
    %s103 = scalar_lea.vmem [#allocation7], %s102
    %v104 = vld [vmem:[%s103] sm:$0xff]
    %v105 = vld [vmem:[%s103 + $0x8] sm:$0xff]
    %v106 = vld [vmem:[%s103 + $0x10] sm:$0xff]
    %v107 = vld [vmem:[%s103 + $0x18] sm:$0xff]
    %v108 = vld [vmem:[%s103 + $0x20] sm:$0xff]
    %v109 = vld [vmem:[%s103 + $0x28] sm:$0xff]
    %v110 = vld [vmem:[%s103 + $0x30] sm:$0xff]
    %v111 = vld [vmem:[%s103 + $0x38] sm:$0xff]
    %v112 = vld [vmem:[%s103 + $0x40] sm:$0xff]
    %v113 = vld [vmem:[%s103 + $0x48] sm:$0xff]
    %v114 = vld [vmem:[%s103 + $0x50] sm:$0xff]
    %v115 = vld [vmem:[%s103 + $0x58] sm:$0xff]
    %v116 = vld [vmem:[%s103 + $0x60] sm:$0xff]
    %v117 = vld [vmem:[%s103 + $0x68] sm:$0xff]
    %v118 = vld [vmem:[%s103 + $0x70] sm:$0xff]
    %v119 = vld [vmem:[%s103 + $0x78] sm:$0xff]
    %s120 = scalar_lea.vmem [#allocation10], %s102
    %v121 = vld [vmem:[%s120] sm:$0xff]
    %v122 = vld [vmem:[%s120 + $0x8] sm:$0xff]
    %v123 = vld [vmem:[%s120 + $0x10] sm:$0xff]
    %v124 = vld [vmem:[%s120 + $0x18] sm:$0xff]
    %v125 = vld [vmem:[%s120 + $0x20] sm:$0xff]
    %v126 = vld [vmem:[%s120 + $0x28] sm:$0xff]
    %v127 = vld [vmem:[%s120 + $0x30] sm:$0xff]
    %v128 = vld [vmem:[%s120 + $0x38] sm:$0xff]
    %v129 = vld [vmem:[%s120 + $0x40] sm:$0xff]
    %v130 = vld [vmem:[%s120 + $0x48] sm:$0xff]
    %v131 = vld [vmem:[%s120 + $0x50] sm:$0xff]
    %v132 = vld [vmem:[%s120 + $0x58] sm:$0xff]
    %v133 = vld [vmem:[%s120 + $0x60] sm:$0xff]
    %v134 = vld [vmem:[%s120 + $0x68] sm:$0xff]
    %v135 = vld [vmem:[%s120 + $0x70] sm:$0xff]
    %v136 = vld [vmem:[%s120 + $0x78] sm:$0xff]
    %137 = vmatprep.subr.mxu0 0.0
    %138 = vmatpush1.msra.mxu0 %v121
    %139 = vmatprep.subr.mxu0 0.0
    %140 = vmatpush1.msra.mxu0 %v122
    %141 = vmatprep.subr.mxu0 0.0
    %142 = vmatpush1.msra.mxu0 %v123
    %143 = vmatprep.subr.mxu0 0.0
    %144 = vmatpush1.msra.mxu0 %v124
    %145 = vmatprep.subr.mxu0 0.0
    %146 = vmatpush1.msra.mxu0 %v125
    %147 = vmatprep.subr.mxu0 0.0
    %148 = vmatpush1.msra.mxu0 %v126
    %149 = vmatprep.subr.mxu0 0.0
    %150 = vmatpush1.msra.mxu0 %v127
    %151 = vmatprep.subr.mxu0 0.0
    %152 = vmatpush1.msra.mxu0 %v128
    %153 = vmatprep.subr.mxu0 0.0
    %154 = vmatpush1.msra.mxu0 %v129
    %155 = vmatprep.subr.mxu0 0.0
    %156 = vmatpush1.msra.mxu0 %v130
    %157 = vmatprep.subr.mxu0 0.0
    %158 = vmatpush1.msra.mxu0 %v131
    %159 = vmatprep.subr.mxu0 0.0
    %160 = vmatpush1.msra.mxu0 %v132
    %161 = vmatprep.subr.mxu0 0.0
    %162 = vmatpush1.msra.mxu0 %v133
    %163 = vmatprep.subr.mxu0 0.0
    %164 = vmatpush1.msra.mxu0 %v134
    %165 = vmatprep.subr.mxu0 0.0
    %166 = vmatpush1.msra.mxu0 %v135
    %167 = vmatprep.subr.mxu0 0.0
    %168 = vmatpush1.msra.mxu0 %v136
    %169 = vmatprep.subr.mxu0 0.0
    %170 = vmatpush1.msra.mxu0 0.0
    %171 = vmatprep.subr.mxu0 0.0
    %172 = vmatpush1.msra.mxu0 0.0
    %173 = vmatprep.subr.mxu0 0.0
    %174 = vmatpush1.msra.mxu0 0.0
    %175 = vmatprep.subr.mxu0 0.0
    %176 = vmatpush1.msra.mxu0 0.0
    %177 = vmatprep.subr.mxu0 0.0
    %178 = vmatpush1.msra.mxu0 0.0
    %179 = vmatprep.subr.mxu0 0.0
    %180 = vmatpush1.msra.mxu0 0.0
    %181 = vmatprep.subr.mxu0 0.0
    %182 = vmatpush1.msra.mxu0 0.0
    %183 = vmatprep.subr.mxu0 0.0
    %184 = vmatpush1.msra.mxu0 0.0
    %185 = vmatprep.subr.mxu0 0.0
    %186 = vmatpush1.msra.mxu0 0.0
    %187 = vmatprep.subr.mxu0 0.0
    %188 = vmatpush1.msra.mxu0 0.0
    %189 = vmatprep.subr.mxu0 0.0
    %190 = vmatpush1.msra.mxu0 0.0
    %191 = vmatprep.subr.mxu0 0.0
    %192 = vmatpush1.msra.mxu0 0.0
    %193 = vmatprep.subr.mxu0 0.0
    %194 = vmatpush1.msra.mxu0 0.0
    %195 = vmatprep.subr.mxu0 0.0
    %196 = vmatpush1.msra.mxu0 0.0
    %197 = vmatprep.subr.mxu0 0.0
    %198 = vmatpush1.msra.mxu0 0.0
    %199 = vmatprep.subr.mxu0 0.0
    %200 = vmatpush1.msra.mxu0 0.0
    %201 = vmatprep.mubr.f32.mxu0 0.0
    %202 = vmatmul.mubr.f32.gmra.mrb[0].mxu0 %v101
    %v203 = vpop.f32.mrb[0].mxu0
    %v204 = vadd.f32 0.0, %v203
    %v205 = vpop.f32.mrb[0].mxu0
    %206 = vdwg.mxu0
    %207 = vmatprep.subr.mxu0 0.0
    %208 = vmatpush1.msra.mxu0 %v104
    %209 = vmatprep.subr.mxu0 0.0
    %210 = vmatpush1.msra.mxu0 %v105
    %211 = vmatprep.subr.mxu0 0.0
    %212 = vmatpush1.msra.mxu0 %v106
    %213 = vmatprep.subr.mxu0 0.0
    %214 = vmatpush1.msra.mxu0 %v107
    %215 = vmatprep.subr.mxu0 0.0
    %216 = vmatpush1.msra.mxu0 %v108
    %217 = vmatprep.subr.mxu0 0.0
    %218 = vmatpush1.msra.mxu0 %v109
    %219 = vmatprep.subr.mxu0 0.0
    %220 = vmatpush1.msra.mxu0 %v110
    %221 = vmatprep.subr.mxu0 0.0
    %222 = vmatpush1.msra.mxu0 %v111
    %223 = vmatprep.subr.mxu0 0.0
    %224 = vmatpush1.msra.mxu0 %v112
    %225 = vmatprep.subr.mxu0 0.0
    %226 = vmatpush1.msra.mxu0 %v113
    %227 = vmatprep.subr.mxu0 0.0
    %228 = vmatpush1.msra.mxu0 %v114
    %229 = vmatprep.subr.mxu0 0.0
    %230 = vmatpush1.msra.mxu0 %v115
    %231 = vmatprep.subr.mxu0 0.0
    %232 = vmatpush1.msra.mxu0 %v116
    %233 = vmatprep.subr.mxu0 0.0
    %234 = vmatpush1.msra.mxu0 %v117
    %235 = vmatprep.subr.mxu0 0.0
    %236 = vmatpush1.msra.mxu0 %v118
    %237 = vmatprep.subr.mxu0 0.0
    %238 = vmatpush1.msra.mxu0 %v119
    %239 = vmatprep.subr.mxu0 0.0
    %240 = vmatpush1.msra.mxu0 0.0
    %241 = vmatprep.subr.mxu0 0.0
    %242 = vmatpush1.msra.mxu0 0.0
    %243 = vmatprep.subr.mxu0 0.0
    %244 = vmatpush1.msra.mxu0 0.0
    %245 = vmatprep.subr.mxu0 0.0
    %246 = vmatpush1.msra.mxu0 0.0
    %247 = vmatprep.subr.mxu0 0.0
    %248 = vmatpush1.msra.mxu0 0.0
    %249 = vmatprep.subr.mxu0 0.0
    %250 = vmatpush1.msra.mxu0 0.0
    %251 = vmatprep.subr.mxu0 0.0
    %252 = vmatpush1.msra.mxu0 0.0
    %253 = vmatprep.subr.mxu0 0.0
    %254 = vmatpush1.msra.mxu0 0.0
    %255 = vmatprep.subr.mxu0 0.0
    %256 = vmatpush1.msra.mxu0 0.0
    %257 = vmatprep.subr.mxu0 0.0
    %258 = vmatpush1.msra.mxu0 0.0
    %259 = vmatprep.subr.mxu0 0.0
    %260 = vmatpush1.msra.mxu0 0.0
    %261 = vmatprep.subr.mxu0 0.0
    %262 = vmatpush1.msra.mxu0 0.0
    %263 = vmatprep.subr.mxu0 0.0
    %264 = vmatpush1.msra.mxu0 0.0
    %265 = vmatprep.subr.mxu0 0.0
    %266 = vmatpush1.msra.mxu0 0.0
    %267 = vmatprep.subr.mxu0 0.0
    %268 = vmatpush1.msra.mxu0 0.0
    %269 = vmatprep.subr.mxu0 0.0
    %270 = vmatpush1.msra.mxu0 0.0
    %271 = vmatprep.mubr.f32.mxu0 0.0
    %272 = vmatmul.mubr.f32.gmra.mrb[0].mxu0 %v99
    %v273 = vpop.f32.mrb[0].mxu0
    %v274 = vadd.f32 %v204, %v273
    %v275 = vpop.f32.mrb[0].mxu0
    %276 = vdwg.mxu0
    %s277 = scalar_lea.vmem %s5, %s95
    %v278 = vld [vmem:[%s277] sm:$0x1]
    %v279 = vadd.f32 %v274, %v278
    %v280 = vmax.f32 %v279, 0.0
    %281 = vst [vmem:[#allocation2 + $0x4] sm:$0x1] %v280
    %s282 = sld [smem:[#allocation4 + $0x1]]
    %s283 = sld [smem:[#allocation5 + $0x1]]
    %s284 = sld [smem:[#allocation6 + $0x1]]
    %s285 = scalar_lea.vmem [#allocation2], %s283
    %v286 = vld [vmem:[%s285] sm:$0x1]
    %s287 = scalar_lea.vmem [#allocation2], %s284
    %v288 = vld [vmem:[%s287] sm:$0x1]
    %s289 = smul.u32 %s282, 128
    %s290 = scalar_lea.vmem [#allocation7], %s289
    %v291 = vld [vmem:[%s290] sm:$0xff]
    %v292 = vld [vmem:[%s290 + $0x8] sm:$0xff]
    %v293 = vld [vmem:[%s290 + $0x10] sm:$0xff]
    %v294 = vld [vmem:[%s290 + $0x18] sm:$0xff]
    %v295 = vld [vmem:[%s290 + $0x20] sm:$0xff]
    %v296 = vld [vmem:[%s290 + $0x28] sm:$0xff]
    %v297 = vld [vmem:[%s290 + $0x30] sm:$0xff]
    %v298 = vld [vmem:[%s290 + $0x38] sm:$0xff]
    %v299 = vld [vmem:[%s290 + $0x40] sm:$0xff]
    %v300 = vld [vmem:[%s290 + $0x48] sm:$0xff]
    %v301 = vld [vmem:[%s290 + $0x50] sm:$0xff]
    %v302 = vld [vmem:[%s290 + $0x58] sm:$0xff]
    %v303 = vld [vmem:[%s290 + $0x60] sm:$0xff]
    %v304 = vld [vmem:[%s290 + $0x68] sm:$0xff]
    %v305 = vld [vmem:[%s290 + $0x70] sm:$0xff]
    %v306 = vld [vmem:[%s290 + $0x78] sm:$0xff]
    %s307 = scalar_lea.vmem [#allocation10], %s289
    %v308 = vld [vmem:[%s307] sm:$0xff]
    %v309 = vld [vmem:[%s307 + $0x8] sm:$0xff]
    %v310 = vld [vmem:[%s307 + $0x10] sm:$0xff]
    %v311 = vld [vmem:[%s307 + $0x18] sm:$0xff]
    %v312 = vld [vmem:[%s307 + $0x20] sm:$0xff]
    %v313 = vld [vmem:[%s307 + $0x28] sm:$0xff]
    %v314 = vld [vmem:[%s307 + $0x30] sm:$0xff]
    %v315 = vld [vmem:[%s307 + $0x38] sm:$0xff]
    %v316 = vld [vmem:[%s307 + $0x40] sm:$0xff]
    %v317 = vld [vmem:[%s307 + $0x48] sm:$0xff]
    %v318 = vld [vmem:[%s307 + $0x50] sm:$0xff]
    %v319 = vld [vmem:[%s307 + $0x58] sm:$0xff]
    %v320 = vld [vmem:[%s307 + $0x60] sm:$0xff]
    %v321 = vld [vmem:[%s307 + $0x68] sm:$0xff]
    %v322 = vld [vmem:[%s307 + $0x70] sm:$0xff]
    %v323 = vld [vmem:[%s307 + $0x78] sm:$0xff]
    %324 = vmatprep.subr.mxu0 0.0
    %325 = vmatpush1.msra.mxu0 %v308
    %326 = vmatprep.subr.mxu0 0.0
    %327 = vmatpush1.msra.mxu0 %v309
    %328 = vmatprep.subr.mxu0 0.0
    %329 = vmatpush1.msra.mxu0 %v310
    %330 = vmatprep.subr.mxu0 0.0
    %331 = vmatpush1.msra.mxu0 %v311
    %332 = vmatprep.subr.mxu0 0.0
    %333 = vmatpush1.msra.mxu0 %v312
    %334 = vmatprep.subr.mxu0 0.0
    %335 = vmatpush1.msra.mxu0 %v313
    %336 = vmatprep.subr.mxu0 0.0
    %337 = vmatpush1.msra.mxu0 %v314
    %338 = vmatprep.subr.mxu0 0.0
    %339 = vmatpush1.msra.mxu0 %v315
    %340 = vmatprep.subr.mxu0 0.0
    %341 = vmatpush1.msra.mxu0 %v316
    %342 = vmatprep.subr.mxu0 0.0
    %343 = vmatpush1.msra.mxu0 %v317
    %344 = vmatprep.subr.mxu0 0.0
    %345 = vmatpush1.msra.mxu0 %v318
    %346 = vmatprep.subr.mxu0 0.0
    %347 = vmatpush1.msra.mxu0 %v319
    %348 = vmatprep.subr.mxu0 0.0
    %349 = vmatpush1.msra.mxu0 %v320
    %350 = vmatprep.subr.mxu0 0.0
    %351 = vmatpush1.msra.mxu0 %v321
    %352 = vmatprep.subr.mxu0 0.0
    %353 = vmatpush1.msra.mxu0 %v322
    %354 = vmatprep.subr.mxu0 0.0
    %355 = vmatpush1.msra.mxu0 %v323
    %356 = vmatprep.subr.mxu0 0.0
    %357 = vmatpush1.msra.mxu0 0.0
    %358 = vmatprep.subr.mxu0 0.0
    %359 = vmatpush1.msra.mxu0 0.0
    %360 = vmatprep.subr.mxu0 0.0
    %361 = vmatpush1.msra.mxu0 0.0
    %362 = vmatprep.subr.mxu0 0.0
    %363 = vmatpush1.msra.mxu0 0.0
    %364 = vmatprep.subr.mxu0 0.0
    %365 = vmatpush1.msra.mxu0 0.0
    %366 = vmatprep.subr.mxu0 0.0
    %367 = vmatpush1.msra.mxu0 0.0
    %368 = vmatprep.subr.mxu0 0.0
    %369 = vmatpush1.msra.mxu0 0.0
    %370 = vmatprep.subr.mxu0 0.0
    %371 = vmatpush1.msra.mxu0 0.0
    %372 = vmatprep.subr.mxu0 0.0
    %373 = vmatpush1.msra.mxu0 0.0
    %374 = vmatprep.subr.mxu0 0.0
    %375 = vmatpush1.msra.mxu0 0.0
    %376 = vmatprep.subr.mxu0 0.0
    %377 = vmatpush1.msra.mxu0 0.0
    %378 = vmatprep.subr.mxu0 0.0
    %379 = vmatpush1.msra.mxu0 0.0
    %380 = vmatprep.subr.mxu0 0.0
    %381 = vmatpush1.msra.mxu0 0.0
    %382 = vmatprep.subr.mxu0 0.0
    %383 = vmatpush1.msra.mxu0 0.0
    %384 = vmatprep.subr.mxu0 0.0
    %385 = vmatpush1.msra.mxu0 0.0
    %386 = vmatprep.subr.mxu0 0.0
    %387 = vmatpush1.msra.mxu0 0.0
    %388 = vmatprep.mubr.f32.mxu0 0.0
    %389 = vmatmul.mubr.f32.gmra.mrb[0].mxu0 %v288
    %v390 = vpop.f32.mrb[0].mxu0
    %v391 = vadd.f32 0.0, %v390
    %v392 = vpop.f32.mrb[0].mxu0
    %393 = vdwg.mxu0
    %394 = vmatprep.subr.mxu0 0.0
    %395 = vmatpush1.msra.mxu0 %v291
    %396 = vmatprep.subr.mxu0 0.0
    %397 = vmatpush1.msra.mxu0 %v292
    %398 = vmatprep.subr.mxu0 0.0
    %399 = vmatpush1.msra.mxu0 %v293
    %400 = vmatprep.subr.mxu0 0.0
    %401 = vmatpush1.msra.mxu0 %v294
    %402 = vmatprep.subr.mxu0 0.0
    %403 = vmatpush1.msra.mxu0 %v295
    %404 = vmatprep.subr.mxu0 0.0
    %405 = vmatpush1.msra.mxu0 %v296
    %406 = vmatprep.subr.mxu0 0.0
    %407 = vmatpush1.msra.mxu0 %v297
    %408 = vmatprep.subr.mxu0 0.0
    %409 = vmatpush1.msra.mxu0 %v298
    %410 = vmatprep.subr.mxu0 0.0
    %411 = vmatpush1.msra.mxu0 %v299
    %412 = vmatprep.subr.mxu0 0.0
    %413 = vmatpush1.msra.mxu0 %v300
    %414 = vmatprep.subr.mxu0 0.0
    %415 = vmatpush1.msra.mxu0 %v301
    %416 = vmatprep.subr.mxu0 0.0
    %417 = vmatpush1.msra.mxu0 %v302
    %418 = vmatprep.subr.mxu0 0.0
    %419 = vmatpush1.msra.mxu0 %v303
    %420 = vmatprep.subr.mxu0 0.0
    %421 = vmatpush1.msra.mxu0 %v304
    %422 = vmatprep.subr.mxu0 0.0
    %423 = vmatpush1.msra.mxu0 %v305
    %424 = vmatprep.subr.mxu0 0.0
    %425 = vmatpush1.msra.mxu0 %v306
    %426 = vmatprep.subr.mxu0 0.0
    %427 = vmatpush1.msra.mxu0 0.0
    %428 = vmatprep.subr.mxu0 0.0
    %429 = vmatpush1.msra.mxu0 0.0
    %430 = vmatprep.subr.mxu0 0.0
    %431 = vmatpush1.msra.mxu0 0.0
    %432 = vmatprep.subr.mxu0 0.0
    %433 = vmatpush1.msra.mxu0 0.0
    %434 = vmatprep.subr.mxu0 0.0
    %435 = vmatpush1.msra.mxu0 0.0
    %436 = vmatprep.subr.mxu0 0.0
    %437 = vmatpush1.msra.mxu0 0.0
    %438 = vmatprep.subr.mxu0 0.0
    %439 = vmatpush1.msra.mxu0 0.0
    %440 = vmatprep.subr.mxu0 0.0
    %441 = vmatpush1.msra.mxu0 0.0
    %442 = vmatprep.subr.mxu0 0.0
    %443 = vmatpush1.msra.mxu0 0.0
    %444 = vmatprep.subr.mxu0 0.0
    %445 = vmatpush1.msra.mxu0 0.0
    %446 = vmatprep.subr.mxu0 0.0
    %447 = vmatpush1.msra.mxu0 0.0
    %448 = vmatprep.subr.mxu0 0.0
    %449 = vmatpush1.msra.mxu0 0.0
    %450 = vmatprep.subr.mxu0 0.0
    %451 = vmatpush1.msra.mxu0 0.0
    %452 = vmatprep.subr.mxu0 0.0
    %453 = vmatpush1.msra.mxu0 0.0
    %454 = vmatprep.subr.mxu0 0.0
    %455 = vmatpush1.msra.mxu0 0.0
    %456 = vmatprep.subr.mxu0 0.0
    %457 = vmatpush1.msra.mxu0 0.0
    %458 = vmatprep.mubr.f32.mxu0 0.0
    %459 = vmatmul.mubr.f32.gmra.mrb[0].mxu0 %v286
    %v460 = vpop.f32.mrb[0].mxu0
    %v461 = vadd.f32 %v391, %v460
    %v462 = vpop.f32.mrb[0].mxu0
    %463 = vdwg.mxu0
    %s464 = scalar_lea.vmem %s5, %s282
    %v465 = vld [vmem:[%s464] sm:$0x1]
    %v466 = vadd.f32 %v461, %v465
    %v467 = vmax.f32 %v466, 0.0
    %468 = vst [vmem:[#allocation2 + $0x5] sm:$0x1] %v467
    %s469 = sld [smem:[#allocation4 + $0x2]]
    %s470 = sld [smem:[#allocation5 + $0x2]]
    %s471 = sld [smem:[#allocation6 + $0x2]]
    %s472 = scalar_lea.vmem [#allocation2], %s470
    %v473 = vld [vmem:[%s472] sm:$0x1]
    %s474 = scalar_lea.vmem [#allocation2], %s471
    %v475 = vld [vmem:[%s474] sm:$0x1]
    %s476 = smul.u32 %s469, 128
    %s477 = scalar_lea.vmem [#allocation7], %s476
    %v478 = vld [vmem:[%s477] sm:$0xff]
    %v479 = vld [vmem:[%s477 + $0x8] sm:$0xff]
    %v480 = vld [vmem:[%s477 + $0x10] sm:$0xff]
    %v481 = vld [vmem:[%s477 + $0x18] sm:$0xff]
    %v482 = vld [vmem:[%s477 + $0x20] sm:$0xff]
    %v483 = vld [vmem:[%s477 + $0x28] sm:$0xff]
    %v484 = vld [vmem:[%s477 + $0x30] sm:$0xff]
    %v485 = vld [vmem:[%s477 + $0x38] sm:$0xff]
    %v486 = vld [vmem:[%s477 + $0x40] sm:$0xff]
    %v487 = vld [vmem:[%s477 + $0x48] sm:$0xff]
    %v488 = vld [vmem:[%s477 + $0x50] sm:$0xff]
    %v489 = vld [vmem:[%s477 + $0x58] sm:$0xff]
    %v490 = vld [vmem:[%s477 + $0x60] sm:$0xff]
    %v491 = vld [vmem:[%s477 + $0x68] sm:$0xff]
    %v492 = vld [vmem:[%s477 + $0x70] sm:$0xff]
    %v493 = vld [vmem:[%s477 + $0x78] sm:$0xff]
    %s494 = scalar_lea.vmem [#allocation10], %s476
    %v495 = vld [vmem:[%s494] sm:$0xff]
    %v496 = vld [vmem:[%s494 + $0x8] sm:$0xff]
    %v497 = vld [vmem:[%s494 + $0x10] sm:$0xff]
    %v498 = vld [vmem:[%s494 + $0x18] sm:$0xff]
    %v499 = vld [vmem:[%s494 + $0x20] sm:$0xff]
    %v500 = vld [vmem:[%s494 + $0x28] sm:$0xff]
    %v501 = vld [vmem:[%s494 + $0x30] sm:$0xff]
    %v502 = vld [vmem:[%s494 + $0x38] sm:$0xff]
    %v503 = vld [vmem:[%s494 + $0x40] sm:$0xff]
    %v504 = vld [vmem:[%s494 + $0x48] sm:$0xff]
    %v505 = vld [vmem:[%s494 + $0x50] sm:$0xff]
    %v506 = vld [vmem:[%s494 + $0x58] sm:$0xff]
    %v507 = vld [vmem:[%s494 + $0x60] sm:$0xff]
    %v508 = vld [vmem:[%s494 + $0x68] sm:$0xff]
    %v509 = vld [vmem:[%s494 + $0x70] sm:$0xff]
    %v510 = vld [vmem:[%s494 + $0x78] sm:$0xff]
    %511 = vmatprep.subr.mxu0 0.0
    %512 = vmatpush1.msra.mxu0 %v495
    %513 = vmatprep.subr.mxu0 0.0
    %514 = vmatpush1.msra.mxu0 %v496
    %515 = vmatprep.subr.mxu0 0.0
    %516 = vmatpush1.msra.mxu0 %v497
    %517 = vmatprep.subr.mxu0 0.0
    %518 = vmatpush1.msra.mxu0 %v498
    %519 = vmatprep.subr.mxu0 0.0
    %520 = vmatpush1.msra.mxu0 %v499
    %521 = vmatprep.subr.mxu0 0.0
    %522 = vmatpush1.msra.mxu0 %v500
    %523 = vmatprep.subr.mxu0 0.0
    %524 = vmatpush1.msra.mxu0 %v501
    %525 = vmatprep.subr.mxu0 0.0
    %526 = vmatpush1.msra.mxu0 %v502
    %527 = vmatprep.subr.mxu0 0.0
    %528 = vmatpush1.msra.mxu0 %v503
    %529 = vmatprep.subr.mxu0 0.0
    %530 = vmatpush1.msra.mxu0 %v504
    %531 = vmatprep.subr.mxu0 0.0
    %532 = vmatpush1.msra.mxu0 %v505
    %533 = vmatprep.subr.mxu0 0.0
    %534 = vmatpush1.msra.mxu0 %v506
    %535 = vmatprep.subr.mxu0 0.0
    %536 = vmatpush1.msra.mxu0 %v507
    %537 = vmatprep.subr.mxu0 0.0
    %538 = vmatpush1.msra.mxu0 %v508
    %539 = vmatprep.subr.mxu0 0.0
    %540 = vmatpush1.msra.mxu0 %v509
    %541 = vmatprep.subr.mxu0 0.0
    %542 = vmatpush1.msra.mxu0 %v510
    %543 = vmatprep.subr.mxu0 0.0
    %544 = vmatpush1.msra.mxu0 0.0
    %545 = vmatprep.subr.mxu0 0.0
    %546 = vmatpush1.msra.mxu0 0.0
    %547 = vmatprep.subr.mxu0 0.0
    %548 = vmatpush1.msra.mxu0 0.0
    %549 = vmatprep.subr.mxu0 0.0
    %550 = vmatpush1.msra.mxu0 0.0
    %551 = vmatprep.subr.mxu0 0.0
    %552 = vmatpush1.msra.mxu0 0.0
    %553 = vmatprep.subr.mxu0 0.0
    %554 = vmatpush1.msra.mxu0 0.0
    %555 = vmatprep.subr.mxu0 0.0
    %556 = vmatpush1.msra.mxu0 0.0
    %557 = vmatprep.subr.mxu0 0.0
    %558 = vmatpush1.msra.mxu0 0.0
    %559 = vmatprep.subr.mxu0 0.0
    %560 = vmatpush1.msra.mxu0 0.0
    %561 = vmatprep.subr.mxu0 0.0
    %562 = vmatpush1.msra.mxu0 0.0
    %563 = vmatprep.subr.mxu0 0.0
    %564 = vmatpush1.msra.mxu0 0.0
    %565 = vmatprep.subr.mxu0 0.0
    %566 = vmatpush1.msra.mxu0 0.0
    %567 = vmatprep.subr.mxu0 0.0
    %568 = vmatpush1.msra.mxu0 0.0
    %569 = vmatprep.subr.mxu0 0.0
    %570 = vmatpush1.msra.mxu0 0.0
    %571 = vmatprep.subr.mxu0 0.0
    %572 = vmatpush1.msra.mxu0 0.0
    %573 = vmatprep.subr.mxu0 0.0
    %574 = vmatpush1.msra.mxu0 0.0
    %575 = vmatprep.mubr.f32.mxu0 0.0
    %576 = vmatmul.mubr.f32.gmra.mrb[0].mxu0 %v475
    %v577 = vpop.f32.mrb[0].mxu0
    %v578 = vadd.f32 0.0, %v577
    %v579 = vpop.f32.mrb[0].mxu0
    %580 = vdwg.mxu0
    %581 = vmatprep.subr.mxu0 0.0
    %582 = vmatpush1.msra.mxu0 %v478
    %583 = vmatprep.subr.mxu0 0.0
    %584 = vmatpush1.msra.mxu0 %v479
    %585 = vmatprep.subr.mxu0 0.0
    %586 = vmatpush1.msra.mxu0 %v480
    %587 = vmatprep.subr.mxu0 0.0
    %588 = vmatpush1.msra.mxu0 %v481
    %589 = vmatprep.subr.mxu0 0.0
    %590 = vmatpush1.msra.mxu0 %v482
    %591 = vmatprep.subr.mxu0 0.0
    %592 = vmatpush1.msra.mxu0 %v483
    %593 = vmatprep.subr.mxu0 0.0
    %594 = vmatpush1.msra.mxu0 %v484
    %595 = vmatprep.subr.mxu0 0.0
    %596 = vmatpush1.msra.mxu0 %v485
    %597 = vmatprep.subr.mxu0 0.0
    %598 = vmatpush1.msra.mxu0 %v486
    %599 = vmatprep.subr.mxu0 0.0
    %600 = vmatpush1.msra.mxu0 %v487
    %601 = vmatprep.subr.mxu0 0.0
    %602 = vmatpush1.msra.mxu0 %v488
    %603 = vmatprep.subr.mxu0 0.0
    %604 = vmatpush1.msra.mxu0 %v489
    %605 = vmatprep.subr.mxu0 0.0
    %606 = vmatpush1.msra.mxu0 %v490
    %607 = vmatprep.subr.mxu0 0.0
    %608 = vmatpush1.msra.mxu0 %v491
    %609 = vmatprep.subr.mxu0 0.0
    %610 = vmatpush1.msra.mxu0 %v492
    %611 = vmatprep.subr.mxu0 0.0
    %612 = vmatpush1.msra.mxu0 %v493
    %613 = vmatprep.subr.mxu0 0.0
    %614 = vmatpush1.msra.mxu0 0.0
    %615 = vmatprep.subr.mxu0 0.0
    %616 = vmatpush1.msra.mxu0 0.0
    %617 = vmatprep.subr.mxu0 0.0
    %618 = vmatpush1.msra.mxu0 0.0
    %619 = vmatprep.subr.mxu0 0.0
    %620 = vmatpush1.msra.mxu0 0.0
    %621 = vmatprep.subr.mxu0 0.0
    %622 = vmatpush1.msra.mxu0 0.0
    %623 = vmatprep.subr.mxu0 0.0
    %624 = vmatpush1.msra.mxu0 0.0
    %625 = vmatprep.subr.mxu0 0.0
    %626 = vmatpush1.msra.mxu0 0.0
    %627 = vmatprep.subr.mxu0 0.0
    %628 = vmatpush1.msra.mxu0 0.0
    %629 = vmatprep.subr.mxu0 0.0
    %630 = vmatpush1.msra.mxu0 0.0
    %631 = vmatprep.subr.mxu0 0.0
    %632 = vmatpush1.msra.mxu0 0.0
    %633 = vmatprep.subr.mxu0 0.0
    %634 = vmatpush1.msra.mxu0 0.0
    %635 = vmatprep.subr.mxu0 0.0
    %636 = vmatpush1.msra.mxu0 0.0
    %637 = vmatprep.subr.mxu0 0.0
    %638 = vmatpush1.msra.mxu0 0.0
    %639 = vmatprep.subr.mxu0 0.0
    %640 = vmatpush1.msra.mxu0 0.0
    %641 = vmatprep.subr.mxu0 0.0
    %642 = vmatpush1.msra.mxu0 0.0
    %643 = vmatprep.subr.mxu0 0.0
    %644 = vmatpush1.msra.mxu0 0.0
    %645 = vmatprep.mubr.f32.mxu0 0.0
    %646 = vmatmul.mubr.f32.gmra.mrb[0].mxu0 %v473
    %v647 = vpop.f32.mrb[0].mxu0
    %v648 = vadd.f32 %v578, %v647
    %v649 = vpop.f32.mrb[0].mxu0
    %650 = vdwg.mxu0
    %s651 = scalar_lea.vmem %s5, %s469
    %v652 = vld [vmem:[%s651] sm:$0x1]
    %v653 = vadd.f32 %v648, %v652
    %v654 = vmax.f32 %v653, 0.0
    %655 = vst [vmem:[#allocation2 + $0x6] sm:$0x1] %v654
    %s656 = sld [smem:[#allocation4 + $0x3]]
    %s657 = sld [smem:[#allocation5 + $0x3]]
    %s658 = sld [smem:[#allocation6 + $0x3]]
    %s659 = scalar_lea.vmem [#allocation2], %s657
    %v660 = vld [vmem:[%s659] sm:$0x1]
    %s661 = scalar_lea.vmem [#allocation2], %s658
    %v662 = vld [vmem:[%s661] sm:$0x1]
    %s663 = smul.u32 %s656, 128
    %s664 = scalar_lea.vmem [#allocation7], %s663
    %v665 = vld [vmem:[%s664] sm:$0xff]
    %v666 = vld [vmem:[%s664 + $0x8] sm:$0xff]
    %v667 = vld [vmem:[%s664 + $0x10] sm:$0xff]
    %v668 = vld [vmem:[%s664 + $0x18] sm:$0xff]
    %v669 = vld [vmem:[%s664 + $0x20] sm:$0xff]
    %v670 = vld [vmem:[%s664 + $0x28] sm:$0xff]
    %v671 = vld [vmem:[%s664 + $0x30] sm:$0xff]
    %v672 = vld [vmem:[%s664 + $0x38] sm:$0xff]
    %v673 = vld [vmem:[%s664 + $0x40] sm:$0xff]
    %v674 = vld [vmem:[%s664 + $0x48] sm:$0xff]
    %v675 = vld [vmem:[%s664 + $0x50] sm:$0xff]
    %v676 = vld [vmem:[%s664 + $0x58] sm:$0xff]
    %v677 = vld [vmem:[%s664 + $0x60] sm:$0xff]
    %v678 = vld [vmem:[%s664 + $0x68] sm:$0xff]
    %v679 = vld [vmem:[%s664 + $0x70] sm:$0xff]
    %v680 = vld [vmem:[%s664 + $0x78] sm:$0xff]
    %s681 = scalar_lea.vmem [#allocation10], %s663
    %v682 = vld [vmem:[%s681] sm:$0xff]
    %v683 = vld [vmem:[%s681 + $0x8] sm:$0xff]
    %v684 = vld [vmem:[%s681 + $0x10] sm:$0xff]
    %v685 = vld [vmem:[%s681 + $0x18] sm:$0xff]
    %v686 = vld [vmem:[%s681 + $0x20] sm:$0xff]
    %v687 = vld [vmem:[%s681 + $0x28] sm:$0xff]
    %v688 = vld [vmem:[%s681 + $0x30] sm:$0xff]
    %v689 = vld [vmem:[%s681 + $0x38] sm:$0xff]
    %v690 = vld [vmem:[%s681 + $0x40] sm:$0xff]
    %v691 = vld [vmem:[%s681 + $0x48] sm:$0xff]
    %v692 = vld [vmem:[%s681 + $0x50] sm:$0xff]
    %v693 = vld [vmem:[%s681 + $0x58] sm:$0xff]
    %v694 = vld [vmem:[%s681 + $0x60] sm:$0xff]
    %v695 = vld [vmem:[%s681 + $0x68] sm:$0xff]
    %v696 = vld [vmem:[%s681 + $0x70] sm:$0xff]
    %v697 = vld [vmem:[%s681 + $0x78] sm:$0xff]
    %698 = vmatprep.subr.mxu0 0.0
    %699 = vmatpush1.msra.mxu0 %v682
    %700 = vmatprep.subr.mxu0 0.0
    %701 = vmatpush1.msra.mxu0 %v683
    %702 = vmatprep.subr.mxu0 0.0
    %703 = vmatpush1.msra.mxu0 %v684
    %704 = vmatprep.subr.mxu0 0.0
    %705 = vmatpush1.msra.mxu0 %v685
    %706 = vmatprep.subr.mxu0 0.0
    %707 = vmatpush1.msra.mxu0 %v686
    %708 = vmatprep.subr.mxu0 0.0
    %709 = vmatpush1.msra.mxu0 %v687
    %710 = vmatprep.subr.mxu0 0.0
    %711 = vmatpush1.msra.mxu0 %v688
    %712 = vmatprep.subr.mxu0 0.0
    %713 = vmatpush1.msra.mxu0 %v689
    %714 = vmatprep.subr.mxu0 0.0
    %715 = vmatpush1.msra.mxu0 %v690
    %716 = vmatprep.subr.mxu0 0.0
    %717 = vmatpush1.msra.mxu0 %v691
    %718 = vmatprep.subr.mxu0 0.0
    %719 = vmatpush1.msra.mxu0 %v692
    %720 = vmatprep.subr.mxu0 0.0
    %721 = vmatpush1.msra.mxu0 %v693
    %722 = vmatprep.subr.mxu0 0.0
    %723 = vmatpush1.msra.mxu0 %v694
    %724 = vmatprep.subr.mxu0 0.0
    %725 = vmatpush1.msra.mxu0 %v695
    %726 = vmatprep.subr.mxu0 0.0
    %727 = vmatpush1.msra.mxu0 %v696
    %728 = vmatprep.subr.mxu0 0.0
    %729 = vmatpush1.msra.mxu0 %v697
    %730 = vmatprep.subr.mxu0 0.0
    %731 = vmatpush1.msra.mxu0 0.0
    %732 = vmatprep.subr.mxu0 0.0
    %733 = vmatpush1.msra.mxu0 0.0
    %734 = vmatprep.subr.mxu0 0.0
    %735 = vmatpush1.msra.mxu0 0.0
    %736 = vmatprep.subr.mxu0 0.0
    %737 = vmatpush1.msra.mxu0 0.0
    %738 = vmatprep.subr.mxu0 0.0
    %739 = vmatpush1.msra.mxu0 0.0
    %740 = vmatprep.subr.mxu0 0.0
    %741 = vmatpush1.msra.mxu0 0.0
    %742 = vmatprep.subr.mxu0 0.0
    %743 = vmatpush1.msra.mxu0 0.0
    %744 = vmatprep.subr.mxu0 0.0
    %745 = vmatpush1.msra.mxu0 0.0
    %746 = vmatprep.subr.mxu0 0.0
    %747 = vmatpush1.msra.mxu0 0.0
    %748 = vmatprep.subr.mxu0 0.0
    %749 = vmatpush1.msra.mxu0 0.0
    %750 = vmatprep.subr.mxu0 0.0
    %751 = vmatpush1.msra.mxu0 0.0
    %752 = vmatprep.subr.mxu0 0.0
    %753 = vmatpush1.msra.mxu0 0.0
    %754 = vmatprep.subr.mxu0 0.0
    %755 = vmatpush1.msra.mxu0 0.0
    %756 = vmatprep.subr.mxu0 0.0
    %757 = vmatpush1.msra.mxu0 0.0
    %758 = vmatprep.subr.mxu0 0.0
    %759 = vmatpush1.msra.mxu0 0.0
    %760 = vmatprep.subr.mxu0 0.0
    %761 = vmatpush1.msra.mxu0 0.0
    %762 = vmatprep.mubr.f32.mxu0 0.0
    %763 = vmatmul.mubr.f32.gmra.mrb[0].mxu0 %v662
    %v764 = vpop.f32.mrb[0].mxu0
    %v765 = vadd.f32 0.0, %v764
    %v766 = vpop.f32.mrb[0].mxu0
    %767 = vdwg.mxu0
    %768 = vmatprep.subr.mxu0 0.0
    %769 = vmatpush1.msra.mxu0 %v665
    %770 = vmatprep.subr.mxu0 0.0
    %771 = vmatpush1.msra.mxu0 %v666
    %772 = vmatprep.subr.mxu0 0.0
    %773 = vmatpush1.msra.mxu0 %v667
    %774 = vmatprep.subr.mxu0 0.0
    %775 = vmatpush1.msra.mxu0 %v668
    %776 = vmatprep.subr.mxu0 0.0
    %777 = vmatpush1.msra.mxu0 %v669
    %778 = vmatprep.subr.mxu0 0.0
    %779 = vmatpush1.msra.mxu0 %v670
    %780 = vmatprep.subr.mxu0 0.0
    %781 = vmatpush1.msra.mxu0 %v671
    %782 = vmatprep.subr.mxu0 0.0
    %783 = vmatpush1.msra.mxu0 %v672
    %784 = vmatprep.subr.mxu0 0.0
    %785 = vmatpush1.msra.mxu0 %v673
    %786 = vmatprep.subr.mxu0 0.0
    %787 = vmatpush1.msra.mxu0 %v674
    %788 = vmatprep.subr.mxu0 0.0
    %789 = vmatpush1.msra.mxu0 %v675
    %790 = vmatprep.subr.mxu0 0.0
    %791 = vmatpush1.msra.mxu0 %v676
    %792 = vmatprep.subr.mxu0 0.0
    %793 = vmatpush1.msra.mxu0 %v677
    %794 = vmatprep.subr.mxu0 0.0
    %795 = vmatpush1.msra.mxu0 %v678
    %796 = vmatprep.subr.mxu0 0.0
    %797 = vmatpush1.msra.mxu0 %v679
    %798 = vmatprep.subr.mxu0 0.0
    %799 = vmatpush1.msra.mxu0 %v680
    %800 = vmatprep.subr.mxu0 0.0
    %801 = vmatpush1.msra.mxu0 0.0
    %802 = vmatprep.subr.mxu0 0.0
    %803 = vmatpush1.msra.mxu0 0.0
    %804 = vmatprep.subr.mxu0 0.0
    %805 = vmatpush1.msra.mxu0 0.0
    %806 = vmatprep.subr.mxu0 0.0
    %807 = vmatpush1.msra.mxu0 0.0
    %808 = vmatprep.subr.mxu0 0.0
    %809 = vmatpush1.msra.mxu0 0.0
    %810 = vmatprep.subr.mxu0 0.0
    %811 = vmatpush1.msra.mxu0 0.0
    %812 = vmatprep.subr.mxu0 0.0
    %813 = vmatpush1.msra.mxu0 0.0
    %814 = vmatprep.subr.mxu0 0.0
    %815 = vmatpush1.msra.mxu0 0.0
    %816 = vmatprep.subr.mxu0 0.0
    %817 = vmatpush1.msra.mxu0 0.0
    %818 = vmatprep.subr.mxu0 0.0
    %819 = vmatpush1.msra.mxu0 0.0
    %820 = vmatprep.subr.mxu0 0.0
    %821 = vmatpush1.msra.mxu0 0.0
    %822 = vmatprep.subr.mxu0 0.0
    %823 = vmatpush1.msra.mxu0 0.0
    %824 = vmatprep.subr.mxu0 0.0
    %825 = vmatpush1.msra.mxu0 0.0
    %826 = vmatprep.subr.mxu0 0.0
    %827 = vmatpush1.msra.mxu0 0.0
    %828 = vmatprep.subr.mxu0 0.0
    %829 = vmatpush1.msra.mxu0 0.0
    %830 = vmatprep.subr.mxu0 0.0
    %831 = vmatpush1.msra.mxu0 0.0
    %832 = vmatprep.mubr.f32.mxu0 0.0
    %833 = vmatmul.mubr.f32.gmra.mrb[0].mxu0 %v660
    %v834 = vpop.f32.mrb[0].mxu0
    %v835 = vadd.f32 %v765, %v834
    %v836 = vpop.f32.mrb[0].mxu0
    %837 = vdwg.mxu0
    %s838 = scalar_lea.vmem %s5, %s656
    %v839 = vld [vmem:[%s838] sm:$0x1]
    %v840 = vadd.f32 %v835, %v839
    %v841 = vmax.f32 %v840, 0.0
    %842 = vst [vmem:[#allocation2 + $0x7] sm:$0x1] %v841
    %s843 = sld [smem:[#allocation4 + $0x4]]
    %s844 = sld [smem:[#allocation5 + $0x4]]
    %s845 = sld [smem:[#allocation6 + $0x4]]
    %s846 = scalar_lea.vmem [#allocation2], %s844
    %v847 = vld [vmem:[%s846] sm:$0x1]
    %s848 = scalar_lea.vmem [#allocation2], %s845
    %v849 = vld [vmem:[%s848] sm:$0x1]
    %s850 = smul.u32 %s843, 128
    %s851 = scalar_lea.vmem [#allocation7], %s850
    %v852 = vld [vmem:[%s851] sm:$0xff]
    %v853 = vld [vmem:[%s851 + $0x8] sm:$0xff]
    %v854 = vld [vmem:[%s851 + $0x10] sm:$0xff]
    %v855 = vld [vmem:[%s851 + $0x18] sm:$0xff]
    %v856 = vld [vmem:[%s851 + $0x20] sm:$0xff]
    %v857 = vld [vmem:[%s851 + $0x28] sm:$0xff]
    %v858 = vld [vmem:[%s851 + $0x30] sm:$0xff]
    %v859 = vld [vmem:[%s851 + $0x38] sm:$0xff]
    %v860 = vld [vmem:[%s851 + $0x40] sm:$0xff]
    %v861 = vld [vmem:[%s851 + $0x48] sm:$0xff]
    %v862 = vld [vmem:[%s851 + $0x50] sm:$0xff]
    %v863 = vld [vmem:[%s851 + $0x58] sm:$0xff]
    %v864 = vld [vmem:[%s851 + $0x60] sm:$0xff]
    %v865 = vld [vmem:[%s851 + $0x68] sm:$0xff]
    %v866 = vld [vmem:[%s851 + $0x70] sm:$0xff]
    %v867 = vld [vmem:[%s851 + $0x78] sm:$0xff]
    %s868 = scalar_lea.vmem [#allocation10], %s850
    %v869 = vld [vmem:[%s868] sm:$0xff]
    %v870 = vld [vmem:[%s868 + $0x8] sm:$0xff]
    %v871 = vld [vmem:[%s868 + $0x10] sm:$0xff]
    %v872 = vld [vmem:[%s868 + $0x18] sm:$0xff]
    %v873 = vld [vmem:[%s868 + $0x20] sm:$0xff]
    %v874 = vld [vmem:[%s868 + $0x28] sm:$0xff]
    %v875 = vld [vmem:[%s868 + $0x30] sm:$0xff]
    %v876 = vld [vmem:[%s868 + $0x38] sm:$0xff]
    %v877 = vld [vmem:[%s868 + $0x40] sm:$0xff]
    %v878 = vld [vmem:[%s868 + $0x48] sm:$0xff]
    %v879 = vld [vmem:[%s868 + $0x50] sm:$0xff]
    %v880 = vld [vmem:[%s868 + $0x58] sm:$0xff]
    %v881 = vld [vmem:[%s868 + $0x60] sm:$0xff]
    %v882 = vld [vmem:[%s868 + $0x68] sm:$0xff]
    %v883 = vld [vmem:[%s868 + $0x70] sm:$0xff]
    %v884 = vld [vmem:[%s868 + $0x78] sm:$0xff]
    %885 = vmatprep.subr.mxu0 0.0
    %886 = vmatpush1.msra.mxu0 %v869
    %887 = vmatprep.subr.mxu0 0.0
    %888 = vmatpush1.msra.mxu0 %v870
    %889 = vmatprep.subr.mxu0 0.0
    %890 = vmatpush1.msra.mxu0 %v871
    %891 = vmatprep.subr.mxu0 0.0
    %892 = vmatpush1.msra.mxu0 %v872
    %893 = vmatprep.subr.mxu0 0.0
    %894 = vmatpush1.msra.mxu0 %v873
    %895 = vmatprep.subr.mxu0 0.0
    %896 = vmatpush1.msra.mxu0 %v874
    %897 = vmatprep.subr.mxu0 0.0
    %898 = vmatpush1.msra.mxu0 %v875
    %899 = vmatprep.subr.mxu0 0.0
    %900 = vmatpush1.msra.mxu0 %v876
    %901 = vmatprep.subr.mxu0 0.0
    %902 = vmatpush1.msra.mxu0 %v877
    %903 = vmatprep.subr.mxu0 0.0
    %904 = vmatpush1.msra.mxu0 %v878
    %905 = vmatprep.subr.mxu0 0.0
    %906 = vmatpush1.msra.mxu0 %v879
    %907 = vmatprep.subr.mxu0 0.0
    %908 = vmatpush1.msra.mxu0 %v880
    %909 = vmatprep.subr.mxu0 0.0
    %910 = vmatpush1.msra.mxu0 %v881
    %911 = vmatprep.subr.mxu0 0.0
    %912 = vmatpush1.msra.mxu0 %v882
    %913 = vmatprep.subr.mxu0 0.0
    %914 = vmatpush1.msra.mxu0 %v883
    %915 = vmatprep.subr.mxu0 0.0
    %916 = vmatpush1.msra.mxu0 %v884
    %917 = vmatprep.subr.mxu0 0.0
    %918 = vmatpush1.msra.mxu0 0.0
    %919 = vmatprep.subr.mxu0 0.0
    %920 = vmatpush1.msra.mxu0 0.0
    %921 = vmatprep.subr.mxu0 0.0
    %922 = vmatpush1.msra.mxu0 0.0
    %923 = vmatprep.subr.mxu0 0.0
    %924 = vmatpush1.msra.mxu0 0.0
    %925 = vmatprep.subr.mxu0 0.0
    %926 = vmatpush1.msra.mxu0 0.0
    %927 = vmatprep.subr.mxu0 0.0
    %928 = vmatpush1.msra.mxu0 0.0
    %929 = vmatprep.subr.mxu0 0.0
    %930 = vmatpush1.msra.mxu0 0.0
    %931 = vmatprep.subr.mxu0 0.0
    %932 = vmatpush1.msra.mxu0 0.0
    %933 = vmatprep.subr.mxu0 0.0
    %934 = vmatpush1.msra.mxu0 0.0
    %935 = vmatprep.subr.mxu0 0.0
    %936 = vmatpush1.msra.mxu0 0.0
    %937 = vmatprep.subr.mxu0 0.0
    %938 = vmatpush1.msra.mxu0 0.0
    %939 = vmatprep.subr.mxu0 0.0
    %940 = vmatpush1.msra.mxu0 0.0
    %941 = vmatprep.subr.mxu0 0.0
    %942 = vmatpush1.msra.mxu0 0.0
    %943 = vmatprep.subr.mxu0 0.0
    %944 = vmatpush1.msra.mxu0 0.0
    %945 = vmatprep.subr.mxu0 0.0
    %946 = vmatpush1.msra.mxu0 0.0
    %947 = vmatprep.subr.mxu0 0.0
    %948 = vmatpush1.msra.mxu0 0.0
    %949 = vmatprep.mubr.f32.mxu0 0.0
    %950 = vmatmul.mubr.f32.gmra.mrb[0].mxu0 %v849
    %v951 = vpop.f32.mrb[0].mxu0
    %v952 = vadd.f32 0.0, %v951
    %v953 = vpop.f32.mrb[0].mxu0
    %954 = vdwg.mxu0
    %955 = vmatprep.subr.mxu0 0.0
    %956 = vmatpush1.msra.mxu0 %v852
    %957 = vmatprep.subr.mxu0 0.0
    %958 = vmatpush1.msra.mxu0 %v853
    %959 = vmatprep.subr.mxu0 0.0
    %960 = vmatpush1.msra.mxu0 %v854
    %961 = vmatprep.subr.mxu0 0.0
    %962 = vmatpush1.msra.mxu0 %v855
    %963 = vmatprep.subr.mxu0 0.0
    %964 = vmatpush1.msra.mxu0 %v856
    %965 = vmatprep.subr.mxu0 0.0
    %966 = vmatpush1.msra.mxu0 %v857
    %967 = vmatprep.subr.mxu0 0.0
    %968 = vmatpush1.msra.mxu0 %v858
    %969 = vmatprep.subr.mxu0 0.0
    %970 = vmatpush1.msra.mxu0 %v859
    %971 = vmatprep.subr.mxu0 0.0
    %972 = vmatpush1.msra.mxu0 %v860
    %973 = vmatprep.subr.mxu0 0.0
    %974 = vmatpush1.msra.mxu0 %v861
    %975 = vmatprep.subr.mxu0 0.0
    %976 = vmatpush1.msra.mxu0 %v862
    %977 = vmatprep.subr.mxu0 0.0
    %978 = vmatpush1.msra.mxu0 %v863
    %979 = vmatprep.subr.mxu0 0.0
    %980 = vmatpush1.msra.mxu0 %v864
    %981 = vmatprep.subr.mxu0 0.0
    %982 = vmatpush1.msra.mxu0 %v865
    %983 = vmatprep.subr.mxu0 0.0
    %984 = vmatpush1.msra.mxu0 %v866
    %985 = vmatprep.subr.mxu0 0.0
    %986 = vmatpush1.msra.mxu0 %v867
    %987 = vmatprep.subr.mxu0 0.0
    %988 = vmatpush1.msra.mxu0 0.0
    %989 = vmatprep.subr.mxu0 0.0
    %990 = vmatpush1.msra.mxu0 0.0
    %991 = vmatprep.subr.mxu0 0.0
    %992 = vmatpush1.msra.mxu0 0.0
    %993 = vmatprep.subr.mxu0 0.0
    %994 = vmatpush1.msra.mxu0 0.0
    %995 = vmatprep.subr.mxu0 0.0
    %996 = vmatpush1.msra.mxu0 0.0
    %997 = vmatprep.subr.mxu0 0.0
    %998 = vmatpush1.msra.mxu0 0.0
    %999 = vmatprep.subr.mxu0 0.0
    %1000 = vmatpush1.msra.mxu0 0.0
    %1001 = vmatprep.subr.mxu0 0.0
    %1002 = vmatpush1.msra.mxu0 0.0
    %1003 = vmatprep.subr.mxu0 0.0
    %1004 = vmatpush1.msra.mxu0 0.0
    %1005 = vmatprep.subr.mxu0 0.0
    %1006 = vmatpush1.msra.mxu0 0.0
    %1007 = vmatprep.subr.mxu0 0.0
    %1008 = vmatpush1.msra.mxu0 0.0
    %1009 = vmatprep.subr.mxu0 0.0
    %1010 = vmatpush1.msra.mxu0 0.0
    %1011 = vmatprep.subr.mxu0 0.0
    %1012 = vmatpush1.msra.mxu0 0.0
    %1013 = vmatprep.subr.mxu0 0.0
    %1014 = vmatpush1.msra.mxu0 0.0
    %1015 = vmatprep.subr.mxu0 0.0
    %1016 = vmatpush1.msra.mxu0 0.0
    %1017 = vmatprep.subr.mxu0 0.0
    %1018 = vmatpush1.msra.mxu0 0.0
    %1019 = vmatprep.mubr.f32.mxu0 0.0
    %1020 = vmatmul.mubr.f32.gmra.mrb[0].mxu0 %v847
    %v1021 = vpop.f32.mrb[0].mxu0
    %v1022 = vadd.f32 %v952, %v1021
    %v1023 = vpop.f32.mrb[0].mxu0
    %1024 = vdwg.mxu0
    %s1025 = scalar_lea.vmem %s5, %s843
    %v1026 = vld [vmem:[%s1025] sm:$0x1]
    %v1027 = vadd.f32 %v1022, %v1026
    %v1028 = vmax.f32 %v1027, 0.0
    %1029 = vst [vmem:[#allocation2 + $0x8] sm:$0x1] %v1028
    %v1030 = vld [vmem:[#allocation2 + $0x8] sm:$0x1]
    %v1031 = vlaneseq
    %v1032 = vshrl.u32 %v1031, 7
    %v1033 = vsub.s32 0, %v1032
    %v1034 = vrot.slane %v1030, %v1033
    %1035 = vst [vmem:[#allocation14] sm:$0xff] %v1034
    %v1036 = vld [vmem:[#allocation12] sm:$0xff]
    %v1037 = vld [vmem:[#allocation12 + $0x8] sm:$0xff]
    %v1038 = vld [vmem:[#allocation12 + $0x10] sm:$0xff]
    %v1039 = vld [vmem:[#allocation12 + $0x18] sm:$0xff]
    %v1040 = vld [vmem:[#allocation12 + $0x20] sm:$0xff]
    %v1041 = vld [vmem:[#allocation12 + $0x28] sm:$0xff]
    %v1042 = vld [vmem:[#allocation12 + $0x30] sm:$0xff]
    %v1043 = vld [vmem:[#allocation12 + $0x38] sm:$0xff]
    %v1044 = vld [vmem:[#allocation12 + $0x40] sm:$0xff]
    %v1045 = vld [vmem:[#allocation12 + $0x48] sm:$0xff]
    %v1046 = vld [vmem:[#allocation12 + $0x50] sm:$0xff]
    %v1047 = vld [vmem:[#allocation12 + $0x58] sm:$0xff]
    %v1048 = vld [vmem:[#allocation12 + $0x60] sm:$0xff]
    %v1049 = vld [vmem:[#allocation12 + $0x68] sm:$0xff]
    %v1050 = vld [vmem:[#allocation12 + $0x70] sm:$0xff]
    %v1051 = vld [vmem:[#allocation12 + $0x78] sm:$0xff]
    %v1052 = vld [vmem:[%s7] sm:$0x1]
    %1053 = vmatprep.subr.mxu0 0.0
    %1054 = vmatpush1.msra.mxu0 %v1036
    %1055 = vmatprep.subr.mxu0 0.0
    %1056 = vmatpush1.msra.mxu0 %v1037
    %1057 = vmatprep.subr.mxu0 0.0
    %1058 = vmatpush1.msra.mxu0 %v1038
    %1059 = vmatprep.subr.mxu0 0.0
    %1060 = vmatpush1.msra.mxu0 %v1039
    %1061 = vmatprep.subr.mxu0 0.0
    %1062 = vmatpush1.msra.mxu0 %v1040
    %1063 = vmatprep.subr.mxu0 0.0
    %1064 = vmatpush1.msra.mxu0 %v1041
    %1065 = vmatprep.subr.mxu0 0.0
    %1066 = vmatpush1.msra.mxu0 %v1042
    %1067 = vmatprep.subr.mxu0 0.0
    %1068 = vmatpush1.msra.mxu0 %v1043
    %1069 = vmatprep.subr.mxu0 0.0
    %1070 = vmatpush1.msra.mxu0 %v1044
    %1071 = vmatprep.subr.mxu0 0.0
    %1072 = vmatpush1.msra.mxu0 %v1045
    %1073 = vmatprep.subr.mxu0 0.0
    %1074 = vmatpush1.msra.mxu0 %v1046
    %1075 = vmatprep.subr.mxu0 0.0
    %1076 = vmatpush1.msra.mxu0 %v1047
    %1077 = vmatprep.subr.mxu0 0.0
    %1078 = vmatpush1.msra.mxu0 %v1048
    %1079 = vmatprep.subr.mxu0 0.0
    %1080 = vmatpush1.msra.mxu0 %v1049
    %1081 = vmatprep.subr.mxu0 0.0
    %1082 = vmatpush1.msra.mxu0 %v1050
    %1083 = vmatprep.subr.mxu0 0.0
    %1084 = vmatpush1.msra.mxu0 %v1051
    %1085 = vmatprep.subr.mxu0 0.0
    %1086 = vmatpush1.msra.mxu0 0.0
    %1087 = vmatprep.subr.mxu0 0.0
    %1088 = vmatpush1.msra.mxu0 0.0
    %1089 = vmatprep.subr.mxu0 0.0
    %1090 = vmatpush1.msra.mxu0 0.0
    %1091 = vmatprep.subr.mxu0 0.0
    %1092 = vmatpush1.msra.mxu0 0.0
    %1093 = vmatprep.subr.mxu0 0.0
    %1094 = vmatpush1.msra.mxu0 0.0
    %1095 = vmatprep.subr.mxu0 0.0
    %1096 = vmatpush1.msra.mxu0 0.0
    %1097 = vmatprep.subr.mxu0 0.0
    %1098 = vmatpush1.msra.mxu0 0.0
    %1099 = vmatprep.subr.mxu0 0.0
    %1100 = vmatpush1.msra.mxu0 0.0
    %1101 = vmatprep.subr.mxu0 0.0
    %1102 = vmatpush1.msra.mxu0 0.0
    %1103 = vmatprep.subr.mxu0 0.0
    %1104 = vmatpush1.msra.mxu0 0.0
    %1105 = vmatprep.subr.mxu0 0.0
    %1106 = vmatpush1.msra.mxu0 0.0
    %1107 = vmatprep.subr.mxu0 0.0
    %1108 = vmatpush1.msra.mxu0 0.0
    %1109 = vmatprep.subr.mxu0 0.0
    %1110 = vmatpush1.msra.mxu0 0.0
    %1111 = vmatprep.subr.mxu0 0.0
    %1112 = vmatpush1.msra.mxu0 0.0
    %1113 = vmatprep.subr.mxu0 0.0
    %1114 = vmatpush1.msra.mxu0 0.0
    %1115 = vmatprep.subr.mxu0 0.0
    %1116 = vmatpush1.msra.mxu0 0.0
    %1117 = vmatprep.mubr.f32.mxu0 0.0
    %1118 = vmatmul.mubr.f32.gmra.mrb[0].mxu0 %v1030
    %v1119 = vpop.f32.mrb[0].mxu0
    %v1120 = vadd.f32 %v1052, %v1119
    %v1121 = vpop.f32.mrb[0].mxu0
    %1122 = vdwg.mxu0
    %v1123 = vlaneseq
    %v1124 = vshrl.u32 %v1123, 7
    %v1125 = vsub.s32 0, %v1124
    %v1126 = vrot.slane %v1120, %v1125
    %1127 = vst [vmem:[#allocation13] sm:$0xff] %v1126
    // Predicated region
    $region34: #{tpu_custom_call.1} parent=1 // pred_check
      _
    $region35: #{tpu_custom_call.1} parent=1 // pred_check_branch
      %1129 = sbr.rel (0) target = $region37
    $region36: #{tpu_custom_call.1} parent=1 // pred_region
      %s1131 = ssub.s32 128, 128
      %1132 = vsyncadd [#allocation9], %s1131
      %s1134 = sshll.u32 [#allocation13], 4
      %s1135 = int_to_ptr.vmem [resolvable:$true] %s1134
      %1137 = dma.vmem_to_hbm [thread:$0]  %s1135, 128, %s8, [#allocation9]
    $region37: #{tpu_custom_call.1} parent=1 // pred_fallthru
      _
    // Predicated region
    $region38: #{tpu_custom_call.1} parent=1 // pred_check
      _
    $region39: #{tpu_custom_call.1} parent=1 // pred_check_branch
      %1139 = sbr.rel (0) target = $region41
    $region40: #{tpu_custom_call.1} parent=1 // pred_region
      %s1141 = ssub.s32 128, 128
      %1142 = vsyncadd [#allocation15], %s1141
      %s1144 = sshll.u32 [#allocation14], 4
      %s1145 = int_to_ptr.vmem [resolvable:$true] %s1144
      %1147 = dma.vmem_to_hbm [thread:$0]  %s1145, 128, %s9, [#allocation15]
    $region41: #{tpu_custom_call.1} parent=1 // pred_fallthru
      _
    // Predicated region
    $region42: #{tpu_custom_call.1} parent=1 // pred_check
      _
    $region43: #{tpu_custom_call.1} parent=1 // pred_check_branch
      %1149 = sbr.rel (0) target = $region45
    $region44: #{tpu_custom_call.1} parent=1 // pred_region
      %1150 = dma.done [#allocation9], 128
    $region45: #{tpu_custom_call.1} parent=1 // pred_fallthru
      _
    // Predicated region
    $region46: #{tpu_custom_call.1} parent=1 // pred_check
      _
    $region47: #{tpu_custom_call.1} parent=1 // pred_check_branch
      %1152 = sbr.rel (0) target = $region49
    $region48: #{tpu_custom_call.1} parent=1 // pred_region
      %1153 = dma.done [#allocation15], 128
    $region49: #{tpu_custom_call.1} parent=1 // pred_fallthru
      _
    %1154 = vsyncpa [#allocation8], 1
    %1155 = vsyncpa [#allocation11], 1
    %1156 = vsyncpa [#allocation9], 1
    %1157 = vsyncpa [#allocation15], 1

</llo_original>
